<compile_context>
chip_gen: v5e
topology: v5e:2x2
jax: 0.10.0
libtpu: 0.0.40
codegen_flags: <defaults>
</compile_context>

<pallas_src>
import functools
import math

import numpy as np
import jax
import jax.numpy as jnp
from jax.experimental import pallas as pl
from jax.experimental.pallas import tpu as pltpu


def _vmem_capacity_bytes():
  """Per-core VMEM capacity; conservative fallback if the query fails."""
  try:
    info = pltpu.get_tpu_info()
    for attr in ("vmem_capacity_bytes", "vmem_size_bytes", "vmem_bytes"):
      v = getattr(info, attr, None)
      if v:
        return int(v)
  except Exception:
    pass
  return 64 * 1024 * 1024  # v7x per-TC size: safe lower bound everywhere


# ----------------------------- kernel A: gather -------------------------------
def _gather_kernel(factors, tile_rows, gW, num_levels, *refs):
  """refs = in_0..in_{L-1}, bsf_out.  Mean of all resized levels for a row tile."""
  L = num_levels
  in_refs = refs[:L]
  out_ref = refs[L]
  C = in_refs[0].shape[-1]
  f32 = jnp.float32

  acc = jnp.zeros((tile_rows, gW, C), f32)
  for i in range(L):
    kind, fy, fx = factors[i]
    if kind == 'pool':           # level larger than gather size: max-pool down
      x5 = in_refs[i][...].astype(f32).reshape(tile_rows, fy, gW, fx, C)
      g = jnp.max(jnp.max(x5, axis=1), axis=2)   # reduce leading axis first
    else:                        # level <= gather size: nearest-upsample
      hb, wb = tile_rows // fy, gW // fx
      x = in_refs[i][...].astype(f32).reshape(hb, wb, C)
      if fy == 1 and fx == 1:
        g = x
      else:
        g = jnp.broadcast_to(x[:, None, :, None, :],
                             (hb, fy, wb, fx, C)).reshape(tile_rows, gW, C)
    acc = acc + g
  out_ref[...] = (acc * (1.0 / float(L))).reshape(
      1, tile_rows, gW, C).astype(out_ref.dtype)


# ------------------------ kernel B: 3x3 refine conv ----------------------------
def _refine_kernel(row_tile, gW, bsf_ref, w_ref, b_ref, out_ref):
  """bsf_ref: (row_tile+2, gW+2, C) bf16 pre-padded + pre-haloed tile,
     w_ref: (9C, C) bf16, b_ref: (1, C) f32, out_ref: (1, row_tile, gW, C) bf16."""
  C = w_ref.shape[-1]
  M = row_tile * gW
  f32 = jnp.float32

  # 9 per-tap MXU dots, f32 accumulation (no im2col scratch, no pad scratch).
  acc = jnp.zeros((M, C), f32)
  for tap in range(9):
    ky, kx = divmod(tap, 3)
    patch = bsf_ref[ky:ky + row_tile, kx:kx + gW, :].reshape(M, C)
    acc = acc + jnp.dot(patch, w_ref[tap * C:(tap + 1) * C, :],
                        preferred_element_type=f32)
  # fused bias epilogue
  out_ref[...] = (acc + b_ref[...]).reshape(
      1, row_tile, gW, C).astype(out_ref.dtype)


# ---------------------- kernel C: scatter + residual add -----------------------
def _scatter_kernel(factors, tile_rows, gW, num_levels, *refs):
  """refs = conv (1,tile_rows,gW,C) bf16, in_0..in_{L-1}, out_0..out_{L-1}."""
  L = num_levels
  conv_ref = refs[0]
  in_refs = refs[1:1 + L]
  out_refs = refs[1 + L:1 + 2 * L]
  C = conv_ref.shape[-1]
  f32 = jnp.float32

  conv = conv_ref[...].astype(f32).reshape(tile_rows, gW, C)
  for i in range(L):
    kind, fy, fx = factors[i]
    odt = out_refs[i].dtype
    if kind == 'pool':
      # level larger than gather size: nearest-upsample conv, fused residual add
      hb, wb = tile_rows * fy, gW * fx
      x5 = in_refs[i][...].astype(f32).reshape(tile_rows, fy, gW, fx, C)
      out5 = x5 + conv[:, None, :, None, :]
      out_refs[i][...] = out5.reshape(1, hb, wb, C).astype(odt)
    else:
      # level <= gather size: adaptive-max-pool conv down, add residual
      hb, wb = tile_rows // fy, gW // fx
      x = in_refs[i][...].astype(f32).reshape(hb, wb, C)
      if fy == 1 and fx == 1:
        pooled = conv
      else:
        c5 = conv.reshape(hb, fy, wb, fx, C)
        pooled = jnp.max(jnp.max(c5, axis=1), axis=2)
      out_refs[i][...] = (pooled + x).reshape(1, hb, wb, C).astype(odt)


# --------------------------------- wrappers ------------------------------------
def bfp_forward_nhwc(inputs_nhwc, weight_oihw, bias, refine_level, *,
                     row_tile=None):
  """inputs_nhwc: list of (N, H_i, W_i, C) arrays.  weight_oihw: (C, C, 3, 3)
  PyTorch-layout conv weight.  bias: (C,).  Returns list of (N, H_i, W_i, C)."""
  L = len(inputs_nhwc)
  N, gH, gW, C = inputs_nhwc[refine_level].shape
  sizes = [(int(x.shape[1]), int(x.shape[2])) for x in inputs_nhwc]

  factors = []
  lcm = 1
  for i, (hi, wi) in enumerate(sizes):
    if i < refine_level:
      assert hi % gH == 0 and wi % gW == 0, "need exact pooling ratios"
      factors.append(('pool', hi // gH, wi // gW))
    else:
      assert gH % hi == 0 and gW % wi == 0, "need exact upsample ratios"
      fy, fx = gH // hi, gW // wi
      lcm = lcm * fy // math.gcd(lcm, fy)
      factors.append(('up', fy, fx))
  factors = tuple(factors)

  # ----- generation-aware budgets -------------------------------------------
  vmem_cap = _vmem_capacity_bytes()
  vmem_limit = max(32 << 20, min((vmem_cap * 7) // 8, 112 << 20))
  tile_budget = (vmem_cap * 2) // 5   # double-buffered working-set target

  # Row tile over gather rows: multiple of every upsample factor, divisor of
  # gH, sized so the SUM of double-buffered in+out tiles across all levels
  # (plus the refined conv tile) stays within the generation-aware budget.
  if row_tile is None:
    per_lcm = lcm * gW * C * 2                      # refined conv tile (bf16)
    for (kind, fy, fx), (hi, wi), x in zip(factors, sizes, inputs_nhwc):
      isz = int(jnp.dtype(x.dtype).itemsize)
      rows = lcm * fy if kind == 'pool' else lcm // fy
      per_lcm += rows * wi * C * isz * 2            # level read + level write
    per_lcm *= 2                                    # double-buffered pipeline
    max_groups = max(1, tile_budget // max(per_lcm, 1))
    row_tile = lcm
    for g in range(1, gH // lcm + 1):
      rt = g * lcm
      if gH % rt == 0 and g <= max_groups:
        row_tile = rt
  assert gH % row_tile == 0 and row_tile % lcm == 0
  T = gH // row_tile

  bf16 = jnp.bfloat16
  # (Cout, Cin, 3, 3) -> (ky, kx, Cin, Cout) -> (9*Cin, Cout), pre-cast to bf16
  # (the MXU consumes bf16 anyway) so the resident weight DMA is halved.
  w = jnp.transpose(weight_oihw, (2, 3, 1, 0)).reshape(9 * C, C).astype(bf16)
  b = bias.reshape(1, C).astype(jnp.float32)

  def level_spec(i):
    kind, fy, fx = factors[i]
    hi, wi = sizes[i]
    rows = row_tile * fy if kind == 'pool' else row_tile // fy
    return pl.BlockSpec((1, rows, wi, C), lambda n, t: (n, t, 0, 0))

  cparams = pltpu.CompilerParams(
      dimension_semantics=("parallel", "parallel"),
      vmem_limit_bytes=vmem_limit)

  # ---- A) gather + mean (bf16 intermediate: A/C are HBM-bandwidth-bound) ---
  bsf = pl.pallas_call(
      functools.partial(_gather_kernel, factors, row_tile, gW, L),
      grid=(N, T),
      in_specs=[level_spec(i) for i in range(L)],
      out_specs=pl.BlockSpec((1, row_tile, gW, C), lambda n, t: (n, t, 0, 0)),
      out_shape=jax.ShapeDtypeStruct((N, gH, gW, C), bf16),
      compiler_params=cparams,
  )(*inputs_nhwc)

  # ---- wrapper-side layout plumbing for the row-tiled refine conv ----------
  # Zero-pad H/W by 1 and duplicate the 1-row halo per row tile so kernel B
  # reads plain non-overlapping BlockSpec tiles (no pad scratch, no manual
  # DMA, no in-kernel halo zeroing).  bsf is the smallest map, so this costs
  # ~2.5x its bytes in HBM -- negligible next to the pyramid traffic of A/C.
  rB = row_tile
  TB = gH // rB
  bsf_pad = jnp.pad(bsf, ((0, 0), (1, 1), (1, 1), (0, 0)))
  bsf_tiles = jnp.stack(
      [bsf_pad[:, t * rB:t * rB + rB + 2] for t in range(TB)],
      axis=1).reshape(N * TB, rB + 2, gW + 2, C)

  # ---- B) 3x3 refine conv (padding=1), row-tiled over gather rows ----------
  refined = pl.pallas_call(
      functools.partial(_refine_kernel, rB, gW),
      grid=(N, TB),
      in_specs=[pl.BlockSpec((None, rB + 2, gW + 2, C),
                             lambda n, t: (n * TB + t, 0, 0, 0)),
                pl.BlockSpec((9 * C, C), lambda n, t: (0, 0)),
                pl.BlockSpec((1, C), lambda n, t: (0, 0))],
      out_specs=pl.BlockSpec((1, rB, gW, C), lambda n, t: (n, t, 0, 0)),
      out_shape=jax.ShapeDtypeStruct((N, gH, gW, C), bf16),
      compiler_params=cparams,
  )(bsf_tiles, w, b)

  # ---- C) scatter refined map back to every level + residual add -----------
  outs = pl.pallas_call(
      functools.partial(_scatter_kernel, factors, row_tile, gW, L),
      grid=(N, T),
      in_specs=[pl.BlockSpec((1, row_tile, gW, C), lambda n, t: (n, t, 0, 0))]
               + [level_spec(i) for i in range(L)],
      out_specs=tuple(level_spec(i) for i in range(L)),
      out_shape=tuple(jax.ShapeDtypeStruct((N, hi, wi, C), x.dtype)
                      for (hi, wi), x in zip(sizes, inputs_nhwc)),
      compiler_params=cparams,
  )(refined, *inputs_nhwc)
  return list(outs)


def bfp_forward(inputs_nchw, weight_oihw, bias, refine_level):
  """PyTorch-parity NCHW wrapper.  In a real model keep activations NHWC and
  call bfp_forward_nhwc directly so these transposes never touch HBM."""
  inputs = [jnp.transpose(x, (0, 2, 3, 1)) for x in inputs_nchw]
  outs = bfp_forward_nhwc(inputs, weight_oihw, bias, refine_level)
  return [jnp.transpose(o, (0, 3, 1, 2)) for o in outs]


# ------------------------- pure-JAX reference (NCHW, f32) ----------------------
def bfp_reference(inputs, weight, bias, refine_level):
  L = len(inputs)
  N, C, gH, gW = inputs[refine_level].shape
  feats = []
  for i, x in enumerate(inputs):
    H, W = x.shape[2], x.shape[3]
    if i < refine_level:
      g = x.reshape(N, C, gH, H // gH, gW, W // gW).max(axis=(3, 5))
    else:
      g = jnp.repeat(jnp.repeat(x, gH // H, axis=2), gW // W, axis=3)
    feats.append(g)
  bsf = sum(feats) / L
  pad = jnp.pad(bsf, ((0, 0), (0, 0), (1, 1), (1, 1)))
  conv = jnp.zeros((N, C, gH, gW), jnp.float32)
  for ky in range(3):
    for kx in range(3):
      conv = conv + jnp.einsum('oi,nihw->nohw', weight[:, :, ky, kx],
                               pad[:, :, ky:ky + gH, kx:kx + gW])
  conv = conv + bias.reshape(1, C, 1, 1)
  outs = []
  for i, x in enumerate(inputs):
    H, W = x.shape[2], x.shape[3]
    if i < refine_level:
      res = jnp.repeat(jnp.repeat(conv, H // gH, axis=2), W // gW, axis=3)
    else:
      res = conv.reshape(N, C, H, gH // H, W, gW // W).max(axis=(3, 5))
    outs.append(res + x)
  return outs


# ------------------------------------ main --------------------------------------
def _run_case(key, N, C, spatial, refine_level, row_tile=None):
  L = len(spatial)
  keys = jax.random.split(key, L + 1)
  inputs = [jax.random.normal(keys[i], (N, C, s, s), jnp.float32)
            for i, s in enumerate(spatial)]
  fan_out = C * 3 * 3
  weight = jax.random.normal(keys[L], (C, C, 3, 3), jnp.float32) * np.sqrt(2.0 / fan_out)
  bias = 0.01 * jnp.arange(C, dtype=jnp.float32)

  if row_tile is None:
    outs = bfp_forward(inputs, weight, bias, refine_level)
  else:
    ins_nhwc = [jnp.transpose(x, (0, 2, 3, 1)) for x in inputs]
    outs = bfp_forward_nhwc(ins_nhwc, weight, bias, refine_level,
                            row_tile=row_tile)
    outs = [jnp.transpose(o, (0, 3, 1, 2)) for o in outs]
  outs = [jax.block_until_ready(o) for o in outs]

  refs = bfp_reference(inputs, weight, bias, refine_level)
  # bf16 MXU operands + bf16 bsf/refined intermediates (f32 accumulation) per
  # TPU perf guidance -> slightly looser tolerance vs the pure-f32 reference.
  for o, r in zip(outs, refs):
    np.testing.assert_allclose(np.asarray(o), np.asarray(r),
                               rtol=2e-2, atol=6e-2)


if __name__ == "__main__":
  key = jax.random.PRNGKey(0)
  k1, k2 = jax.random.split(key)
  # Small config (C=4): exercises a multi-tile row grid (gather 8x8 with
  # row_tile=4 -> 2 row tiles per batch element for all three kernels).
  _run_case(k1, N=2, C=4, spatial=[32, 16, 8, 4], refine_level=2, row_tile=4)
  # Lane-dense config (C=128): exercises the automatic, generation-aware
  # row-tile selection and full-lane MXU taps.
  _run_case(k2, N=2, C=128, spatial=[32, 16, 8, 4], refine_level=2)
  print("KERNEL_OK")
</pallas_src>

<mosaic_0001>
module attributes {stable_mosaic.version = 11 : i64} {
  func.func @_gather_kernel(%arg0: i32, %arg1: i32, %arg2: memref<1x16x32x4xf32, #tpu.memory_space<vmem>>, %arg3: memref<1x8x16x4xf32, #tpu.memory_space<vmem>>, %arg4: memref<1x4x8x4xf32, #tpu.memory_space<vmem>>, %arg5: memref<1x2x4x4xf32, #tpu.memory_space<vmem>>, %arg6: memref<1x4x8x4xbf16, #tpu.memory_space<vmem>>) attributes {dimension_semantics = [#tpu.dimension_semantics<parallel>, #tpu.dimension_semantics<parallel>], iteration_bounds = array<i64: 2, 2>, scalar_prefetch = 0 : i64, scratch_operands = 0 : i64, tpu.core_type = #tpu.core_type<tc>, window_params = [{transform_indices = @transform_0, window_bounds = array<i64: 1, 16, 32, 4>}, {transform_indices = @transform_1, window_bounds = array<i64: 1, 8, 16, 4>}, {transform_indices = @transform_2, window_bounds = array<i64: 1, 4, 8, 4>}, {transform_indices = @transform_3, window_bounds = array<i64: 1, 2, 4, 4>}, {transform_indices = @transform_4, window_bounds = array<i64: 1, 4, 8, 4>}]} {
    %cst = arith.constant 0.000000e+00 : f32
    %0 = vector.broadcast %cst : f32 to vector<4x8x4xf32>
    %c0 = arith.constant 0 : index
    %c0_0 = arith.constant 0 : index
    %c0_1 = arith.constant 0 : index
    %c0_2 = arith.constant 0 : index
    %1 = vector.load %arg2[%c0, %c0_0, %c0_1, %c0_2] : memref<1x16x32x4xf32, #tpu.memory_space<vmem>>, vector<1x16x32x4xf32>
    %2 = vector.shape_cast %1 : vector<1x16x32x4xf32> to vector<4x4x8x4x4xf32>
    %cst_3 = arith.constant dense<0xFF800000> : vector<4x8x4x4xf32>
    %3 = vector.multi_reduction <maximumf>, %2, %cst_3 [1] : vector<4x4x8x4x4xf32> to vector<4x8x4x4xf32>
    %cst_4 = arith.constant dense<0xFF800000> : vector<4x8x4xf32>
    %4 = vector.multi_reduction <maximumf>, %3, %cst_4 [2] : vector<4x8x4x4xf32> to vector<4x8x4xf32>
    %5 = arith.addf %0, %4 : vector<4x8x4xf32>
    %c0_5 = arith.constant 0 : index
    %c0_6 = arith.constant 0 : index
    %c0_7 = arith.constant 0 : index
    %c0_8 = arith.constant 0 : index
    %6 = vector.load %arg3[%c0_5, %c0_6, %c0_7, %c0_8] : memref<1x8x16x4xf32, #tpu.memory_space<vmem>>, vector<1x8x16x4xf32>
    %7 = vector.shape_cast %6 : vector<1x8x16x4xf32> to vector<4x2x8x2x4xf32>
    %cst_9 = arith.constant dense<0xFF800000> : vector<4x8x2x4xf32>
    %8 = vector.multi_reduction <maximumf>, %7, %cst_9 [1] : vector<4x2x8x2x4xf32> to vector<4x8x2x4xf32>
    %cst_10 = arith.constant dense<0xFF800000> : vector<4x8x4xf32>
    %9 = vector.multi_reduction <maximumf>, %8, %cst_10 [2] : vector<4x8x2x4xf32> to vector<4x8x4xf32>
    %10 = arith.addf %5, %9 : vector<4x8x4xf32>
    %c0_11 = arith.constant 0 : index
    %c0_12 = arith.constant 0 : index
    %c0_13 = arith.constant 0 : index
    %c0_14 = arith.constant 0 : index
    %11 = vector.load %arg4[%c0_11, %c0_12, %c0_13, %c0_14] : memref<1x4x8x4xf32, #tpu.memory_space<vmem>>, vector<1x4x8x4xf32>
    %12 = vector.shape_cast %11 : vector<1x4x8x4xf32> to vector<4x8x4xf32>
    %13 = arith.addf %10, %12 : vector<4x8x4xf32>
    %c0_15 = arith.constant 0 : index
    %c0_16 = arith.constant 0 : index
    %c0_17 = arith.constant 0 : index
    %c0_18 = arith.constant 0 : index
    %14 = vector.load %arg5[%c0_15, %c0_16, %c0_17, %c0_18] : memref<1x2x4x4xf32, #tpu.memory_space<vmem>>, vector<1x2x4x4xf32>
    %15 = vector.shape_cast %14 : vector<1x2x4x4xf32> to vector<2x4x4xf32>
    %16 = vector.shape_cast %15 : vector<2x4x4xf32> to vector<2x1x4x1x4xf32>
    %17 = vector.shape_cast %16 : vector<2x1x4x1x4xf32> to vector<2x1x4x1x4xf32>
    %18 = vector.broadcast %17 : vector<2x1x4x1x4xf32> to vector<2x2x4x2x4xf32>
    %19 = vector.shape_cast %18 : vector<2x2x4x2x4xf32> to vector<4x8x4xf32>
    %20 = arith.addf %13, %19 : vector<4x8x4xf32>
    %cst_19 = arith.constant 2.500000e-01 : f32
    %21 = vector.broadcast %cst_19 : f32 to vector<4x8x4xf32>
    %22 = arith.mulf %20, %21 : vector<4x8x4xf32>
    %23 = vector.shape_cast %22 : vector<4x8x4xf32> to vector<1x4x8x4xf32>
    %24 = arith.truncf %23 : vector<1x4x8x4xf32> to vector<1x4x8x4xbf16>
    %c0_20 = arith.constant 0 : index
    %c0_21 = arith.constant 0 : index
    %c0_22 = arith.constant 0 : index
    %c0_23 = arith.constant 0 : index
    %25 = vector.load %arg6[%c0_20, %c0_21, %c0_22, %c0_23] : memref<1x4x8x4xbf16, #tpu.memory_space<vmem>>, vector<1x4x8x4xbf16>
    tpu.vector_store %arg6[%c0_20, %c0_21, %c0_22, %c0_23], %24 {strides = array<i32>} : memref<1x4x8x4xbf16, #tpu.memory_space<vmem>>, vector<1x4x8x4xbf16>,
    return
  }
  func.func @transform_0(%arg0: i32, %arg1: i32) -> (i32, i32, i32, i32) {
    %c0_i32 = arith.constant 0 : i32
    %c0_i32_0 = arith.constant 0 : i32
    %c0_i32_1 = arith.constant 0 : i32
    return %arg0, %arg1, %c0_i32, %c0_i32_0 : i32, i32, i32, i32
  }
  func.func @transform_1(%arg0: i32, %arg1: i32) -> (i32, i32, i32, i32) {
    %c0_i32 = arith.constant 0 : i32
    %c0_i32_0 = arith.constant 0 : i32
    %c0_i32_1 = arith.constant 0 : i32
    return %arg0, %arg1, %c0_i32, %c0_i32_0 : i32, i32, i32, i32
  }
  func.func @transform_2(%arg0: i32, %arg1: i32) -> (i32, i32, i32, i32) {
    %c0_i32 = arith.constant 0 : i32
    %c0_i32_0 = arith.constant 0 : i32
    %c0_i32_1 = arith.constant 0 : i32
    return %arg0, %arg1, %c0_i32, %c0_i32_0 : i32, i32, i32, i32
  }
  func.func @transform_3(%arg0: i32, %arg1: i32) -> (i32, i32, i32, i32) {
    %c0_i32 = arith.constant 0 : i32
    %c0_i32_0 = arith.constant 0 : i32
    %c0_i32_1 = arith.constant 0 : i32
    return %arg0, %arg1, %c0_i32, %c0_i32_0 : i32, i32, i32, i32
  }
  func.func @transform_4(%arg0: i32, %arg1: i32) -> (i32, i32, i32, i32) {
    %c0_i32 = arith.constant 0 : i32
    %c0_i32_0 = arith.constant 0 : i32
    %c0_i32_1 = arith.constant 0 : i32
    return %arg0, %arg1, %c0_i32, %c0_i32_0 : i32, i32, i32, i32
  }
}

</mosaic_0001>

<llo_original>
// kernel: tpu_custom_call.1
$region0: #{tpu_custom_call.1}
  #allocation0 [shape = 'u32[]', space=smem, size = 0x4, offset = 0x4, fixed_abs, tag = 'smem constant byte address 0x4 - core index']
  #allocation1 [shape = 'u32[72,128]{1,0:T(1,128)}', space=vmem, size = 0x9000, scoped, tag = 'internal scratch']
  %s0 = inlined_call_operand.vmem [shape: f32[2,32,32,4], index: 0, kind: input, shape index: {}]
  %s1 = inlined_call_operand.vmem [shape: f32[2,16,16,4], index: 1, kind: input, shape index: {}]
  %s2 = inlined_call_operand.vmem [shape: f32[2,8,8,4], index: 2, kind: input, shape index: {}]
  %s3 = inlined_call_operand.vmem [shape: f32[2,4,4,4], index: 3, kind: input, shape index: {}]
  %s4 = inlined_call_operand.vmem [shape: bf16[2,8,8,4], index: 4, kind: output, shape index: {}]
  %s5 = sld [smem:[#allocation0]]
  $region49: #{tpu_custom_call.1} parent=0
    _
  %s7 = ssub.s32 1, %s5
  %s8 = scalar_select 0, %s7, %s5
  loop: start=0, step=1, limit=6
  $region2: #{tpu_custom_call.1} parent=0 // loop_pre_header
    _
  $region3: #{tpu_custom_call.1} parent=0 // loop_header
    %s10 = sphi 0, %s14
    %p11 = scmp.ge.s32.totalorder %s10, 6
    %s17 = sphi 0, %s29
    %s18 = sphi 0, %s25
    %s19 = sphi 0, %s17
    %s20 = sphi 0, %s18
    %s21 = sphi 0, %s19
    %s22 = sphi 0, %s20
    %s34 = sphi 0, %s36
    %s37 = sphi 0, %s34
    %s38 = sphi 0, %s37
    %s54 = sphi 0, %s38
    %s62 = sphi 0, %s64
    %s65 = sphi 0, %s62
    %s66 = sphi 0, %s65
    %s82 = sphi 0, %s66
    %s90 = sphi 0, %s92
    %s93 = sphi 0, %s90
    %s94 = sphi 0, %s93
    %s110 = sphi 0, %s94
    %s118 = sphi 0, %s120
    %s121 = sphi 0, %s118
    %s122 = sphi 0, %s121
    %s138 = sphi 0, %s122
    %s146 = sphi 0, %s148
    %s149 = sphi 0, %s146
    %s150 = sphi 0, %s149
    %s166 = sphi 0, %s150
  $region4: #{tpu_custom_call.1} parent=0 // loop_header_branch
    %13 = sbr.rel (%p11) target = $region8
  $region5: #{tpu_custom_call.1} parent=0 // loop_body
    %s15 = ssub.s32 %s10, 1
    %s16 = ssub.s32 %s10, 2
    %s23 = sadd.s32 1, %s18
    %p24 = scmp.ge.s32.totalorder %s23, 2
    %s25 = scalar_select %p24, 0, %s23
    %s26 = sadd.s32 1, %s17
    %s27 = scalar_select %p24, %s26, %s17
    %p28 = scmp.ge.s32.totalorder %s27, 2
    %s29 = scalar_select %p28, 0, %s27
    %s30 = ssub.s32 %s17, %s29
    %s31 = ssub.s32 %s18, %s25
    %s32 = sor.u32 %s30, %s31
    %p33 = scmp.eq.s32.totalorder %s32, 0
    %s35 = sadd.s32 %s34, 1
    %s36 = scalar_select %p33, %s34, %s35
    %p39 = pneg %p33
    %p40 = scmp.eq.s32.totalorder %s10, 3
    %p41 = por %p39, %p40
    %p42 = scmp.ne.s32.totalorder %s34, %s37
    %p43 = scmp.eq.s32.totalorder %s10, 0
    %p44 = por %p42, %p43
    %p45 = scmp.ne.s32.totalorder %s34, %s37
    %p46 = scmp.eq.s32.totalorder %s15, 3
    %p47 = por %p45, %p46
    %p48 = scmp.ne.s32.totalorder %s37, %s38
    %p49 = scmp.eq.s32.totalorder %s15, 0
    %p50 = por %p48, %p49
    %p51 = scmp.ne.s32.totalorder %s37, %s38
    %p52 = scmp.eq.s32.totalorder %s16, 3
    %p53 = por %p51, %p52
    %p55 = scmp.ne.s32.totalorder %s38, %s54
    %p56 = scmp.eq.s32.totalorder %s16, 0
    %p57 = por %p55, %p56
    %s58 = ssub.s32 %s17, %s29
    %s59 = ssub.s32 %s18, %s25
    %s60 = sor.u32 %s58, %s59
    %p61 = scmp.eq.s32.totalorder %s60, 0
    %s63 = sadd.s32 %s62, 1
    %s64 = scalar_select %p61, %s62, %s63
    %p67 = pneg %p61
    %p68 = scmp.eq.s32.totalorder %s10, 3
    %p69 = por %p67, %p68
    %p70 = scmp.ne.s32.totalorder %s62, %s65
    %p71 = scmp.eq.s32.totalorder %s10, 0
    %p72 = por %p70, %p71
    %p73 = scmp.ne.s32.totalorder %s62, %s65
    %p74 = scmp.eq.s32.totalorder %s15, 3
    %p75 = por %p73, %p74
    %p76 = scmp.ne.s32.totalorder %s65, %s66
    %p77 = scmp.eq.s32.totalorder %s15, 0
    %p78 = por %p76, %p77
    %p79 = scmp.ne.s32.totalorder %s65, %s66
    %p80 = scmp.eq.s32.totalorder %s16, 3
    %p81 = por %p79, %p80
    %p83 = scmp.ne.s32.totalorder %s66, %s82
    %p84 = scmp.eq.s32.totalorder %s16, 0
    %p85 = por %p83, %p84
    %s86 = ssub.s32 %s17, %s29
    %s87 = ssub.s32 %s18, %s25
    %s88 = sor.u32 %s86, %s87
    %p89 = scmp.eq.s32.totalorder %s88, 0
    %s91 = sadd.s32 %s90, 1
    %s92 = scalar_select %p89, %s90, %s91
    %p95 = pneg %p89
    %p96 = scmp.eq.s32.totalorder %s10, 3
    %p97 = por %p95, %p96
    %p98 = scmp.ne.s32.totalorder %s90, %s93
    %p99 = scmp.eq.s32.totalorder %s10, 0
    %p100 = por %p98, %p99
    %p101 = scmp.ne.s32.totalorder %s90, %s93
    %p102 = scmp.eq.s32.totalorder %s15, 3
    %p103 = por %p101, %p102
    %p104 = scmp.ne.s32.totalorder %s93, %s94
    %p105 = scmp.eq.s32.totalorder %s15, 0
    %p106 = por %p104, %p105
    %p107 = scmp.ne.s32.totalorder %s93, %s94
    %p108 = scmp.eq.s32.totalorder %s16, 3
    %p109 = por %p107, %p108
    %p111 = scmp.ne.s32.totalorder %s94, %s110
    %p112 = scmp.eq.s32.totalorder %s16, 0
    %p113 = por %p111, %p112
    %s114 = ssub.s32 %s17, %s29
    %s115 = ssub.s32 %s18, %s25
    %s116 = sor.u32 %s114, %s115
    %p117 = scmp.eq.s32.totalorder %s116, 0
    %s119 = sadd.s32 %s118, 1
    %s120 = scalar_select %p117, %s118, %s119
    %p123 = pneg %p117
    %p124 = scmp.eq.s32.totalorder %s10, 3
    %p125 = por %p123, %p124
    %p126 = scmp.ne.s32.totalorder %s118, %s121
    %p127 = scmp.eq.s32.totalorder %s10, 0
    %p128 = por %p126, %p127
    %p129 = scmp.ne.s32.totalorder %s118, %s121
    %p130 = scmp.eq.s32.totalorder %s15, 3
    %p131 = por %p129, %p130
    %p132 = scmp.ne.s32.totalorder %s121, %s122
    %p133 = scmp.eq.s32.totalorder %s15, 0
    %p134 = por %p132, %p133
    %p135 = scmp.ne.s32.totalorder %s121, %s122
    %p136 = scmp.eq.s32.totalorder %s16, 3
    %p137 = por %p135, %p136
    %p139 = scmp.ne.s32.totalorder %s122, %s138
    %p140 = scmp.eq.s32.totalorder %s16, 0
    %p141 = por %p139, %p140
    %s142 = ssub.s32 %s17, %s29
    %s143 = ssub.s32 %s18, %s25
    %s144 = sor.u32 %s142, %s143
    %p145 = scmp.eq.s32.totalorder %s144, 0
    %s147 = sadd.s32 %s146, 1
    %s148 = scalar_select %p145, %s146, %s147
    %p151 = pneg %p145
    %p152 = scmp.eq.s32.totalorder %s10, 3
    %p153 = por %p151, %p152
    %p154 = scmp.ne.s32.totalorder %s146, %s149
    %p155 = scmp.eq.s32.totalorder %s10, 0
    %p156 = por %p154, %p155
    %p157 = scmp.ne.s32.totalorder %s146, %s149
    %p158 = scmp.eq.s32.totalorder %s15, 3
    %p159 = por %p157, %p158
    %p160 = scmp.ne.s32.totalorder %s149, %s150
    %p161 = scmp.eq.s32.totalorder %s15, 0
    %p162 = por %p160, %p161
    %p163 = scmp.ne.s32.totalorder %s149, %s150
    %p164 = scmp.eq.s32.totalorder %s16, 3
    %p165 = por %p163, %p164
    %p167 = scmp.ne.s32.totalorder %s150, %s166
    %p168 = scmp.eq.s32.totalorder %s16, 0
    %p169 = por %p167, %p168
    %p170 = scmp.le.s32.totalorder 1, %s10
    %p171 = scmp.lt.s32.totalorder %s10, 5
    %p172 = pnand %p170, %p171
    %p173 = pneg %p172
    // Predicated region
    $region9: #{tpu_custom_call.1} parent=5 // pred_check
      _
    $region10: #{tpu_custom_call.1} parent=5 // pred_check_branch
      %175 = sbr.rel (%p172) target = $region12
    $region11: #{tpu_custom_call.1} parent=5 // pred_region
      %s176 = ssub.s32 %s10, 1
    $region12: #{tpu_custom_call.1} parent=5 // pred_fallthru
      _
    %p177 = scmp.lt.s32.totalorder %s10, 4
    // Predicated region
    $region13: #{tpu_custom_call.1} parent=5 // pred_check
      %p178 = pneg %p177
    $region14: #{tpu_custom_call.1} parent=5 // pred_check_branch
      %180 = sbr.rel (%p178) target = $region16
    $region15: #{tpu_custom_call.1} parent=5 // pred_region
      // Predicated region
      $region17: #{tpu_custom_call.1} parent=15 // pred_check
        %p181 = pneg %p44
      $region18: #{tpu_custom_call.1} parent=15 // pred_check_branch
        %183 = sbr.rel (%p181) target = $region20
      $region19: #{tpu_custom_call.1} parent=15 // pred_region
        %s184 = smul.u32 16, %s18
        %p185 = scmp.lt.s32.totalorder %s17, 1
        %s186 = scalar_select %p185, %s17, 1
        %p187 = scmp.lt.s32.totalorder %s184, 31
        %s188 = scalar_select %p187, %s184, 31
        %s189 = smul.addr %s188, 4
        %s190 = smul.addr %s186, 128
        %s191 = sadd.s32 %s189, %s190
        %s192 = smul.addr %s191, 8
        %s193 = scalar_lea.vmem %s0, %s192
        %s194 = smul.u32 16, %s18
      $region20: #{tpu_custom_call.1} parent=15 // pred_fallthru
        _
      // Predicated region
      $region21: #{tpu_custom_call.1} parent=15 // pred_check
        %p195 = pneg %p72
      $region22: #{tpu_custom_call.1} parent=15 // pred_check_branch
        %197 = sbr.rel (%p195) target = $region24
      $region23: #{tpu_custom_call.1} parent=15 // pred_region
        %s198 = smul.u32 8, %s18
        %p199 = scmp.lt.s32.totalorder %s17, 1
        %s200 = scalar_select %p199, %s17, 1
        %p201 = scmp.lt.s32.totalorder %s198, 15
        %s202 = scalar_select %p201, %s198, 15
        %s203 = smul.addr %s202, 2
        %s204 = smul.addr %s200, 32
        %s205 = sadd.s32 %s203, %s204
        %s206 = smul.addr %s205, 8
        %s207 = scalar_lea.vmem %s1, %s206
        %s208 = smul.u32 8, %s18
      $region24: #{tpu_custom_call.1} parent=15 // pred_fallthru
        _
      // Predicated region
      $region25: #{tpu_custom_call.1} parent=15 // pred_check
        %p209 = pneg %p100
      $region26: #{tpu_custom_call.1} parent=15 // pred_check_branch
        %211 = sbr.rel (%p209) target = $region28
      $region27: #{tpu_custom_call.1} parent=15 // pred_region
        %s212 = smul.u32 4, %s18
        %p213 = scmp.lt.s32.totalorder %s17, 1
        %s214 = scalar_select %p213, %s17, 1
        %p215 = scmp.lt.s32.totalorder %s212, 7
        %s216 = scalar_select %p215, %s212, 7
        %s217 = smul.addr %s214, 8
        %s218 = sadd.s32 %s216, %s217
        %s219 = smul.addr %s218, 8
        %s220 = scalar_lea.vmem %s2, %s219
        %s221 = smul.u32 4, %s18
      $region28: #{tpu_custom_call.1} parent=15 // pred_fallthru
        _
      // Predicated region
      $region29: #{tpu_custom_call.1} parent=15 // pred_check
        %p222 = pneg %p128
      $region30: #{tpu_custom_call.1} parent=15 // pred_check_branch
        %224 = sbr.rel (%p222) target = $region32
      $region31: #{tpu_custom_call.1} parent=15 // pred_region
        %s225 = smul.u32 2, %s18
        %p226 = scmp.lt.s32.totalorder %s17, 1
        %s227 = scalar_select %p226, %s17, 1
        %p228 = scmp.lt.s32.totalorder %s225, 3
        %s229 = scalar_select %p228, %s225, 3
        %s230 = smul.addr %s227, 4
        %s231 = sadd.s32 %s229, %s230
        %s232 = smul.addr %s231, 4
        %s233 = scalar_lea.vmem %s3, %s232
        %s234 = smul.u32 2, %s18
      $region32: #{tpu_custom_call.1} parent=15 // pred_fallthru
        _
    $region16: #{tpu_custom_call.1} parent=5 // pred_fallthru
      _
    %p235 = scmp.le.s32.totalorder 1, %s10
    %p236 = scmp.lt.s32.totalorder %s10, 5
    %p237 = pnand %p235, %p236
    %p238 = pneg %p237
    // Predicated region
    $region33: #{tpu_custom_call.1} parent=5 // pred_check
      _
    $region34: #{tpu_custom_call.1} parent=5 // pred_check_branch
      %240 = sbr.rel (%p237) target = $region36
    $region35: #{tpu_custom_call.1} parent=5 // pred_region
      %s241 = ssub.s32 %s10, 1
      %s242 = smul.u32 16, %s20
      %p243 = scmp.lt.s32.totalorder %s19, 1
      %s244 = scalar_select %p243, %s19, 1
      %p245 = scmp.lt.s32.totalorder %s242, 31
      %s246 = scalar_select %p245, %s242, 31
      %s247 = smul.addr %s246, 4
      %s248 = smul.addr %s244, 128
      %s249 = sadd.s32 %s247, %s248
      %s250 = smul.addr %s249, 8
      %s251 = scalar_lea.vmem %s0, %s250
      %p252 = pneg %p50
      %p253 = pneg %p47
      %s254 = smul.u32 8, %s20
      %p255 = scmp.lt.s32.totalorder %s19, 1
      %s256 = scalar_select %p255, %s19, 1
      %p257 = scmp.lt.s32.totalorder %s254, 15
      %s258 = scalar_select %p257, %s254, 15
      %s259 = smul.addr %s258, 2
      %s260 = smul.addr %s256, 32
      %s261 = sadd.s32 %s259, %s260
      %s262 = smul.addr %s261, 8
      %s263 = scalar_lea.vmem %s1, %s262
      %p264 = pneg %p78
      %p265 = pneg %p75
      %s266 = smul.u32 4, %s20
      %p267 = scmp.lt.s32.totalorder %s19, 1
      %s268 = scalar_select %p267, %s19, 1
      %p269 = scmp.lt.s32.totalorder %s266, 7
      %s270 = scalar_select %p269, %s266, 7
      %s271 = smul.addr %s268, 8
      %s272 = sadd.s32 %s270, %s271
      %s273 = smul.addr %s272, 8
      %s274 = scalar_lea.vmem %s2, %s273
      %p275 = pneg %p106
      %p276 = pneg %p103
      %s277 = smul.u32 2, %s20
      %p278 = scmp.lt.s32.totalorder %s19, 1
      %s279 = scalar_select %p278, %s19, 1
      %p280 = scmp.lt.s32.totalorder %s277, 3
      %s281 = scalar_select %p280, %s277, 3
      %s282 = smul.addr %s279, 4
      %s283 = sadd.s32 %s281, %s282
      %s284 = smul.addr %s283, 4
      %s285 = scalar_lea.vmem %s3, %s284
      %p286 = pneg %p134
      %p287 = pneg %p131
      %p288 = pneg %p162
      %p289 = pneg %p159
      %s290 = smul.u32 4, %s20
      %p291 = scmp.lt.s32.totalorder %s19, 1
      %s292 = scalar_select %p291, %s19, 1
      %p293 = scmp.lt.s32.totalorder %s290, 7
      %s294 = scalar_select %p293, %s290, 7
      %s295 = smul.addr %s292, 8
      %s296 = sadd.s32 %s294, %s295
      %s297 = smul.addr %s296, 4
      %s298 = scalar_lea.vmem %s4, %s297
      %s299 = smul.u32 16, %s20
      %p300 = scmp.lt.s32.totalorder %s19, 1
      %s301 = scalar_select %p300, %s19, 1
      %p302 = scmp.lt.s32.totalorder %s299, 31
      %s303 = scalar_select %p302, %s299, 31
      %s304 = smul.addr %s303, 4
      %s305 = smul.addr %s301, 128
      %s306 = sadd.s32 %s304, %s305
      %s307 = smul.addr %s306, 8
      %s308 = scalar_lea.vmem %s0, %s307
      %s309 = smul.u32 16, %s20
      %s310 = smul.u32 8, %s20
      %p311 = scmp.lt.s32.totalorder %s19, 1
      %s312 = scalar_select %p311, %s19, 1
      %p313 = scmp.lt.s32.totalorder %s310, 15
      %s314 = scalar_select %p313, %s310, 15
      %s315 = smul.addr %s314, 2
      %s316 = smul.addr %s312, 32
      %s317 = sadd.s32 %s315, %s316
      %s318 = smul.addr %s317, 8
      %s319 = scalar_lea.vmem %s1, %s318
      %s320 = smul.u32 8, %s20
      %s321 = smul.u32 4, %s20
      %p322 = scmp.lt.s32.totalorder %s19, 1
      %s323 = scalar_select %p322, %s19, 1
      %p324 = scmp.lt.s32.totalorder %s321, 7
      %s325 = scalar_select %p324, %s321, 7
      %s326 = smul.addr %s323, 8
      %s327 = sadd.s32 %s325, %s326
      %s328 = smul.addr %s327, 8
      %s329 = scalar_lea.vmem %s2, %s328
      %s330 = smul.u32 4, %s20
      %s331 = smul.u32 2, %s20
      %p332 = scmp.lt.s32.totalorder %s19, 1
      %s333 = scalar_select %p332, %s19, 1
      %p334 = scmp.lt.s32.totalorder %s331, 3
      %s335 = scalar_select %p334, %s331, 3
      %s336 = smul.addr %s333, 4
      %s337 = sadd.s32 %s335, %s336
      %s338 = smul.addr %s337, 4
      %s339 = scalar_lea.vmem %s3, %s338
      %s340 = smul.u32 2, %s20
      %s341 = smul.u32 4, %s20
      %p342 = scmp.lt.s32.totalorder %s19, 1
      %s343 = scalar_select %p342, %s19, 1
      %p344 = scmp.lt.s32.totalorder %s341, 7
      %s345 = scalar_select %p344, %s341, 7
      %s346 = smul.addr %s343, 8
      %s347 = sadd.s32 %s345, %s346
      %s348 = smul.addr %s347, 4
      %s349 = scalar_lea.vmem %s4, %s348
      %s350 = smul.u32 4, %s20
      %v351 = vld [vmem:[%s308] sm:$0xff]
      %v352 = vld [vmem:[%s308 + $0x8] sm:$0xff]
      %v353 = vld [vmem:[%s308 + $0x10] sm:$0xff]
      %v354 = vld [vmem:[%s308 + $0x18] sm:$0xff]
      %v355 = vld [vmem:[%s308 + $0x20] sm:$0xff]
      %v356 = vld [vmem:[%s308 + $0x28] sm:$0xff]
      %v357 = vld [vmem:[%s308 + $0x30] sm:$0xff]
      %v358 = vld [vmem:[%s308 + $0x38] sm:$0xff]
      %v359 = vld [vmem:[%s308 + $0x40] sm:$0xff]
      %v360 = vld [vmem:[%s308 + $0x48] sm:$0xff]
      %v361 = vld [vmem:[%s308 + $0x50] sm:$0xff]
      %v362 = vld [vmem:[%s308 + $0x58] sm:$0xff]
      %v363 = vld [vmem:[%s308 + $0x60] sm:$0xff]
      %v364 = vld [vmem:[%s308 + $0x68] sm:$0xff]
      %v365 = vld [vmem:[%s308 + $0x70] sm:$0xff]
      %v366 = vld [vmem:[%s308 + $0x78] sm:$0xff]
      %v367 = vld [vmem:[%s308 + $0x80] sm:$0xff]
      %v368 = vld [vmem:[%s308 + $0x88] sm:$0xff]
      %v369 = vld [vmem:[%s308 + $0x90] sm:$0xff]
      %v370 = vld [vmem:[%s308 + $0x98] sm:$0xff]
      %v371 = vld [vmem:[%s308 + $0xa0] sm:$0xff]
      %v372 = vld [vmem:[%s308 + $0xa8] sm:$0xff]
      %v373 = vld [vmem:[%s308 + $0xb0] sm:$0xff]
      %v374 = vld [vmem:[%s308 + $0xb8] sm:$0xff]
      %v375 = vld [vmem:[%s308 + $0xc0] sm:$0xff]
      %v376 = vld [vmem:[%s308 + $0xc8] sm:$0xff]
      %v377 = vld [vmem:[%s308 + $0xd0] sm:$0xff]
      %v378 = vld [vmem:[%s308 + $0xd8] sm:$0xff]
      %v379 = vld [vmem:[%s308 + $0xe0] sm:$0xff]
      %v380 = vld [vmem:[%s308 + $0xe8] sm:$0xff]
      %v381 = vld [vmem:[%s308 + $0xf0] sm:$0xff]
      %v382 = vld [vmem:[%s308 + $0xf8] sm:$0xff]
      %v383 = vld [vmem:[%s308 + $0x100] sm:$0xff]
      %v384 = vld [vmem:[%s308 + $0x108] sm:$0xff]
      %v385 = vld [vmem:[%s308 + $0x110] sm:$0xff]
      %v386 = vld [vmem:[%s308 + $0x118] sm:$0xff]
      %v387 = vld [vmem:[%s308 + $0x120] sm:$0xff]
      %v388 = vld [vmem:[%s308 + $0x128] sm:$0xff]
      %v389 = vld [vmem:[%s308 + $0x130] sm:$0xff]
      %v390 = vld [vmem:[%s308 + $0x138] sm:$0xff]
      %v391 = vld [vmem:[%s308 + $0x140] sm:$0xff]
      %v392 = vld [vmem:[%s308 + $0x148] sm:$0xff]
      %v393 = vld [vmem:[%s308 + $0x150] sm:$0xff]
      %v394 = vld [vmem:[%s308 + $0x158] sm:$0xff]
      %v395 = vld [vmem:[%s308 + $0x160] sm:$0xff]
      %v396 = vld [vmem:[%s308 + $0x168] sm:$0xff]
      %v397 = vld [vmem:[%s308 + $0x170] sm:$0xff]
      %v398 = vld [vmem:[%s308 + $0x178] sm:$0xff]
      %v399 = vld [vmem:[%s308 + $0x180] sm:$0xff]
      %v400 = vld [vmem:[%s308 + $0x188] sm:$0xff]
      %v401 = vld [vmem:[%s308 + $0x190] sm:$0xff]
      %v402 = vld [vmem:[%s308 + $0x198] sm:$0xff]
      %v403 = vld [vmem:[%s308 + $0x1a0] sm:$0xff]
      %v404 = vld [vmem:[%s308 + $0x1a8] sm:$0xff]
      %v405 = vld [vmem:[%s308 + $0x1b0] sm:$0xff]
      %v406 = vld [vmem:[%s308 + $0x1b8] sm:$0xff]
      %v407 = vld [vmem:[%s308 + $0x1c0] sm:$0xff]
      %v408 = vld [vmem:[%s308 + $0x1c8] sm:$0xff]
      %v409 = vld [vmem:[%s308 + $0x1d0] sm:$0xff]
      %v410 = vld [vmem:[%s308 + $0x1d8] sm:$0xff]
      %v411 = vld [vmem:[%s308 + $0x1e0] sm:$0xff]
      %v412 = vld [vmem:[%s308 + $0x1e8] sm:$0xff]
      %v413 = vld [vmem:[%s308 + $0x1f0] sm:$0xff]
      %v414 = vld [vmem:[%s308 + $0x1f8] sm:$0xff]
      %v479 = vrot.slane %v351, 4
      %v480 = vrot.slane %v352, 4
      %v481 = vrot.slane %v353, 4
      %v482 = vrot.slane %v354, 4
      %v483 = vrot.slane %v355, 4
      %v484 = vrot.slane %v356, 4
      %v485 = vrot.slane %v357, 4
      %v486 = vrot.slane %v358, 4
      %v487 = vrot.slane %v359, 4
      %v488 = vrot.slane %v360, 4
      %v489 = vrot.slane %v361, 4
      %v490 = vrot.slane %v362, 4
      %v491 = vrot.slane %v363, 4
      %v492 = vrot.slane %v364, 4
      %v493 = vrot.slane %v365, 4
      %v494 = vrot.slane %v366, 4
      %v495 = vrot.slane %v367, 4
      %v496 = vrot.slane %v368, 4
      %v497 = vrot.slane %v369, 4
      %v498 = vrot.slane %v370, 4
      %v499 = vrot.slane %v371, 4
      %v500 = vrot.slane %v372, 4
      %v501 = vrot.slane %v373, 4
      %v502 = vrot.slane %v374, 4
      %v503 = vrot.slane %v375, 4
      %v504 = vrot.slane %v376, 4
      %v505 = vrot.slane %v377, 4
      %v506 = vrot.slane %v378, 4
      %v507 = vrot.slane %v379, 4
      %v508 = vrot.slane %v380, 4
      %v509 = vrot.slane %v381, 4
      %v510 = vrot.slane %v382, 4
      %v511 = vrot.slane %v383, 4
      %v512 = vrot.slane %v384, 4
      %v513 = vrot.slane %v385, 4
      %v514 = vrot.slane %v386, 4
      %v515 = vrot.slane %v387, 4
      %v516 = vrot.slane %v388, 4
      %v517 = vrot.slane %v389, 4
      %v518 = vrot.slane %v390, 4
      %v519 = vrot.slane %v391, 4
      %v520 = vrot.slane %v392, 4
      %v521 = vrot.slane %v393, 4
      %v522 = vrot.slane %v394, 4
      %v523 = vrot.slane %v395, 4
      %v524 = vrot.slane %v396, 4
      %v525 = vrot.slane %v397, 4
      %v526 = vrot.slane %v398, 4
      %v527 = vrot.slane %v399, 4
      %v528 = vrot.slane %v400, 4
      %v529 = vrot.slane %v401, 4
      %v530 = vrot.slane %v402, 4
      %v531 = vrot.slane %v403, 4
      %v532 = vrot.slane %v404, 4
      %v533 = vrot.slane %v405, 4
      %v534 = vrot.slane %v406, 4
      %v535 = vrot.slane %v407, 4
      %v536 = vrot.slane %v408, 4
      %v537 = vrot.slane %v409, 4
      %v538 = vrot.slane %v410, 4
      %v539 = vrot.slane %v411, 4
      %v540 = vrot.slane %v412, 4
      %v541 = vrot.slane %v413, 4
      %v542 = vrot.slane %v414, 4
      %vm607 = vcmask 27648
      %v608 = vsel %vm607, %v351, -inf
      %v609 = vsel %vm607, %v355, -inf
      %v610 = vmax.f32 %v608, %v609
      %v611 = vsel %vm607, %v359, -inf
      %v612 = vmax.f32 %v610, %v611
      %v613 = vsel %vm607, %v363, -inf
      %v614 = vmax.f32 %v612, %v613
      %v615 = vsel %vm607, %v479, -inf
      %v616 = vsel %vm607, %v483, -inf
      %v617 = vmax.f32 %v615, %v616
      %v618 = vsel %vm607, %v487, -inf
      %v619 = vmax.f32 %v617, %v618
      %v620 = vsel %vm607, %v491, -inf
      %v621 = vmax.f32 %v619, %v620
      %v622 = vsel %vm607, %v352, -inf
      %v623 = vsel %vm607, %v356, -inf
      %v624 = vmax.f32 %v622, %v623
      %v625 = vsel %vm607, %v360, -inf
      %v626 = vmax.f32 %v624, %v625
      %v627 = vsel %vm607, %v364, -inf
      %v628 = vmax.f32 %v626, %v627
      %v629 = vsel %vm607, %v480, -inf
      %v630 = vsel %vm607, %v484, -inf
      %v631 = vmax.f32 %v629, %v630
      %v632 = vsel %vm607, %v488, -inf
      %v633 = vmax.f32 %v631, %v632
      %v634 = vsel %vm607, %v492, -inf
      %v635 = vmax.f32 %v633, %v634
      %v636 = vsel %vm607, %v353, -inf
      %v637 = vsel %vm607, %v357, -inf
      %v638 = vmax.f32 %v636, %v637
      %v639 = vsel %vm607, %v361, -inf
      %v640 = vmax.f32 %v638, %v639
      %v641 = vsel %vm607, %v365, -inf
      %v642 = vmax.f32 %v640, %v641
      %v643 = vsel %vm607, %v481, -inf
      %v644 = vsel %vm607, %v485, -inf
      %v645 = vmax.f32 %v643, %v644
      %v646 = vsel %vm607, %v489, -inf
      %v647 = vmax.f32 %v645, %v646
      %v648 = vsel %vm607, %v493, -inf
      %v649 = vmax.f32 %v647, %v648
      %v650 = vsel %vm607, %v354, -inf
      %v651 = vsel %vm607, %v358, -inf
      %v652 = vmax.f32 %v650, %v651
      %v653 = vsel %vm607, %v362, -inf
      %v654 = vmax.f32 %v652, %v653
      %v655 = vsel %vm607, %v366, -inf
      %v656 = vmax.f32 %v654, %v655
      %v657 = vsel %vm607, %v482, -inf
      %v658 = vsel %vm607, %v486, -inf
      %v659 = vmax.f32 %v657, %v658
      %v660 = vsel %vm607, %v490, -inf
      %v661 = vmax.f32 %v659, %v660
      %v662 = vsel %vm607, %v494, -inf
      %v663 = vmax.f32 %v661, %v662
      %v664 = vsel %vm607, %v367, -inf
      %v665 = vsel %vm607, %v371, -inf
      %v666 = vmax.f32 %v664, %v665
      %v667 = vsel %vm607, %v375, -inf
      %v668 = vmax.f32 %v666, %v667
      %v669 = vsel %vm607, %v379, -inf
      %v670 = vmax.f32 %v668, %v669
      %v671 = vsel %vm607, %v495, -inf
      %v672 = vsel %vm607, %v499, -inf
      %v673 = vmax.f32 %v671, %v672
      %v674 = vsel %vm607, %v503, -inf
      %v675 = vmax.f32 %v673, %v674
      %v676 = vsel %vm607, %v507, -inf
      %v677 = vmax.f32 %v675, %v676
      %v678 = vsel %vm607, %v368, -inf
      %v679 = vsel %vm607, %v372, -inf
      %v680 = vmax.f32 %v678, %v679
      %v681 = vsel %vm607, %v376, -inf
      %v682 = vmax.f32 %v680, %v681
      %v683 = vsel %vm607, %v380, -inf
      %v684 = vmax.f32 %v682, %v683
      %v685 = vsel %vm607, %v496, -inf
      %v686 = vsel %vm607, %v500, -inf
      %v687 = vmax.f32 %v685, %v686
      %v688 = vsel %vm607, %v504, -inf
      %v689 = vmax.f32 %v687, %v688
      %v690 = vsel %vm607, %v508, -inf
      %v691 = vmax.f32 %v689, %v690
      %v692 = vsel %vm607, %v369, -inf
      %v693 = vsel %vm607, %v373, -inf
      %v694 = vmax.f32 %v692, %v693
      %v695 = vsel %vm607, %v377, -inf
      %v696 = vmax.f32 %v694, %v695
      %v697 = vsel %vm607, %v381, -inf
      %v698 = vmax.f32 %v696, %v697
      %v699 = vsel %vm607, %v497, -inf
      %v700 = vsel %vm607, %v501, -inf
      %v701 = vmax.f32 %v699, %v700
      %v702 = vsel %vm607, %v505, -inf
      %v703 = vmax.f32 %v701, %v702
      %v704 = vsel %vm607, %v509, -inf
      %v705 = vmax.f32 %v703, %v704
      %v706 = vsel %vm607, %v370, -inf
      %v707 = vsel %vm607, %v374, -inf
      %v708 = vmax.f32 %v706, %v707
      %v709 = vsel %vm607, %v378, -inf
      %v710 = vmax.f32 %v708, %v709
      %v711 = vsel %vm607, %v382, -inf
      %v712 = vmax.f32 %v710, %v711
      %v713 = vsel %vm607, %v498, -inf
      %v714 = vsel %vm607, %v502, -inf
      %v715 = vmax.f32 %v713, %v714
      %v716 = vsel %vm607, %v506, -inf
      %v717 = vmax.f32 %v715, %v716
      %v718 = vsel %vm607, %v510, -inf
      %v719 = vmax.f32 %v717, %v718
      %v720 = vsel %vm607, %v383, -inf
      %v721 = vsel %vm607, %v387, -inf
      %v722 = vmax.f32 %v720, %v721
      %v723 = vsel %vm607, %v391, -inf
      %v724 = vmax.f32 %v722, %v723
      %v725 = vsel %vm607, %v395, -inf
      %v726 = vmax.f32 %v724, %v725
      %v727 = vsel %vm607, %v511, -inf
      %v728 = vsel %vm607, %v515, -inf
      %v729 = vmax.f32 %v727, %v728
      %v730 = vsel %vm607, %v519, -inf
      %v731 = vmax.f32 %v729, %v730
      %v732 = vsel %vm607, %v523, -inf
      %v733 = vmax.f32 %v731, %v732
      %v734 = vsel %vm607, %v384, -inf
      %v735 = vsel %vm607, %v388, -inf
      %v736 = vmax.f32 %v734, %v735
      %v737 = vsel %vm607, %v392, -inf
      %v738 = vmax.f32 %v736, %v737
      %v739 = vsel %vm607, %v396, -inf
      %v740 = vmax.f32 %v738, %v739
      %v741 = vsel %vm607, %v512, -inf
      %v742 = vsel %vm607, %v516, -inf
      %v743 = vmax.f32 %v741, %v742
      %v744 = vsel %vm607, %v520, -inf
      %v745 = vmax.f32 %v743, %v744
      %v746 = vsel %vm607, %v524, -inf
      %v747 = vmax.f32 %v745, %v746
      %v748 = vsel %vm607, %v385, -inf
      %v749 = vsel %vm607, %v389, -inf
      %v750 = vmax.f32 %v748, %v749
      %v751 = vsel %vm607, %v393, -inf
      %v752 = vmax.f32 %v750, %v751
      %v753 = vsel %vm607, %v397, -inf
      %v754 = vmax.f32 %v752, %v753
      %v755 = vsel %vm607, %v513, -inf
      %v756 = vsel %vm607, %v517, -inf
      %v757 = vmax.f32 %v755, %v756
      %v758 = vsel %vm607, %v521, -inf
      %v759 = vmax.f32 %v757, %v758
      %v760 = vsel %vm607, %v525, -inf
      %v761 = vmax.f32 %v759, %v760
      %v762 = vsel %vm607, %v386, -inf
      %v763 = vsel %vm607, %v390, -inf
      %v764 = vmax.f32 %v762, %v763
      %v765 = vsel %vm607, %v394, -inf
      %v766 = vmax.f32 %v764, %v765
      %v767 = vsel %vm607, %v398, -inf
      %v768 = vmax.f32 %v766, %v767
      %v769 = vsel %vm607, %v514, -inf
      %v770 = vsel %vm607, %v518, -inf
      %v771 = vmax.f32 %v769, %v770
      %v772 = vsel %vm607, %v522, -inf
      %v773 = vmax.f32 %v771, %v772
      %v774 = vsel %vm607, %v526, -inf
      %v775 = vmax.f32 %v773, %v774
      %v776 = vsel %vm607, %v399, -inf
      %v777 = vsel %vm607, %v403, -inf
      %v778 = vmax.f32 %v776, %v777
      %v779 = vsel %vm607, %v407, -inf
      %v780 = vmax.f32 %v778, %v779
      %v781 = vsel %vm607, %v411, -inf
      %v782 = vmax.f32 %v780, %v781
      %v783 = vsel %vm607, %v527, -inf
      %v784 = vsel %vm607, %v531, -inf
      %v785 = vmax.f32 %v783, %v784
      %v786 = vsel %vm607, %v535, -inf
      %v787 = vmax.f32 %v785, %v786
      %v788 = vsel %vm607, %v539, -inf
      %v789 = vmax.f32 %v787, %v788
      %v790 = vsel %vm607, %v400, -inf
      %v791 = vsel %vm607, %v404, -inf
      %v792 = vmax.f32 %v790, %v791
      %v793 = vsel %vm607, %v408, -inf
      %v794 = vmax.f32 %v792, %v793
      %v795 = vsel %vm607, %v412, -inf
      %v796 = vmax.f32 %v794, %v795
      %v797 = vsel %vm607, %v528, -inf
      %v798 = vsel %vm607, %v532, -inf
      %v799 = vmax.f32 %v797, %v798
      %v800 = vsel %vm607, %v536, -inf
      %v801 = vmax.f32 %v799, %v800
      %v802 = vsel %vm607, %v540, -inf
      %v803 = vmax.f32 %v801, %v802
      %v804 = vsel %vm607, %v401, -inf
      %v805 = vsel %vm607, %v405, -inf
      %v806 = vmax.f32 %v804, %v805
      %v807 = vsel %vm607, %v409, -inf
      %v808 = vmax.f32 %v806, %v807
      %v809 = vsel %vm607, %v413, -inf
      %v810 = vmax.f32 %v808, %v809
      %v811 = vsel %vm607, %v529, -inf
      %v812 = vsel %vm607, %v533, -inf
      %v813 = vmax.f32 %v811, %v812
      %v814 = vsel %vm607, %v537, -inf
      %v815 = vmax.f32 %v813, %v814
      %v816 = vsel %vm607, %v541, -inf
      %v817 = vmax.f32 %v815, %v816
      %v818 = vsel %vm607, %v402, -inf
      %v819 = vsel %vm607, %v406, -inf
      %v820 = vmax.f32 %v818, %v819
      %v821 = vsel %vm607, %v410, -inf
      %v822 = vmax.f32 %v820, %v821
      %v823 = vsel %vm607, %v414, -inf
      %v824 = vmax.f32 %v822, %v823
      %v825 = vsel %vm607, %v530, -inf
      %v826 = vsel %vm607, %v534, -inf
      %v827 = vmax.f32 %v825, %v826
      %v828 = vsel %vm607, %v538, -inf
      %v829 = vmax.f32 %v827, %v828
      %v830 = vsel %vm607, %v542, -inf
      %v831 = vmax.f32 %v829, %v830
      %v832 = vsel %vm607, %v614, -inf
      %v833 = vrot.slane %v832, 4
      %v834 = vmax.f32 %v832, %v833
      %v835 = vrot.slane %v834, 2
      %v836 = vmax.f32 %v834, %v835
      %v837 = vrot.slane %v836, 1
      %v838 = vmax.f32 %v836, %v837
      %v839 = vsel %vm607, %v621, -inf
      %v840 = vrot.slane %v839, 4
      %v841 = vmax.f32 %v839, %v840
      %v842 = vrot.slane %v841, 2
      %v843 = vmax.f32 %v841, %v842
      %v844 = vrot.slane %v843, 1
      %v845 = vmax.f32 %v843, %v844
      %v846 = vsel %vm607, %v628, -inf
      %v847 = vrot.slane %v846, 4
      %v848 = vmax.f32 %v846, %v847
      %v849 = vrot.slane %v848, 2
      %v850 = vmax.f32 %v848, %v849
      %v851 = vrot.slane %v850, 1
      %v852 = vmax.f32 %v850, %v851
      %v853 = vsel %vm607, %v635, -inf
      %v854 = vrot.slane %v853, 4
      %v855 = vmax.f32 %v853, %v854
      %v856 = vrot.slane %v855, 2
      %v857 = vmax.f32 %v855, %v856
      %v858 = vrot.slane %v857, 1
      %v859 = vmax.f32 %v857, %v858
      %v860 = vsel %vm607, %v642, -inf
      %v861 = vrot.slane %v860, 4
      %v862 = vmax.f32 %v860, %v861
      %v863 = vrot.slane %v862, 2
      %v864 = vmax.f32 %v862, %v863
      %v865 = vrot.slane %v864, 1
      %v866 = vmax.f32 %v864, %v865
      %v867 = vsel %vm607, %v649, -inf
      %v868 = vrot.slane %v867, 4
      %v869 = vmax.f32 %v867, %v868
      %v870 = vrot.slane %v869, 2
      %v871 = vmax.f32 %v869, %v870
      %v872 = vrot.slane %v871, 1
      %v873 = vmax.f32 %v871, %v872
      %v874 = vsel %vm607, %v656, -inf
      %v875 = vrot.slane %v874, 4
      %v876 = vmax.f32 %v874, %v875
      %v877 = vrot.slane %v876, 2
      %v878 = vmax.f32 %v876, %v877
      %v879 = vrot.slane %v878, 1
      %v880 = vmax.f32 %v878, %v879
      %v881 = vsel %vm607, %v663, -inf
      %v882 = vrot.slane %v881, 4
      %v883 = vmax.f32 %v881, %v882
      %v884 = vrot.slane %v883, 2
      %v885 = vmax.f32 %v883, %v884
      %v886 = vrot.slane %v885, 1
      %v887 = vmax.f32 %v885, %v886
      %v888 = vsel %vm607, %v670, -inf
      %v889 = vrot.slane %v888, 4
      %v890 = vmax.f32 %v888, %v889
      %v891 = vrot.slane %v890, 2
      %v892 = vmax.f32 %v890, %v891
      %v893 = vrot.slane %v892, 1
      %v894 = vmax.f32 %v892, %v893
      %v895 = vsel %vm607, %v677, -inf
      %v896 = vrot.slane %v895, 4
      %v897 = vmax.f32 %v895, %v896
      %v898 = vrot.slane %v897, 2
      %v899 = vmax.f32 %v897, %v898
      %v900 = vrot.slane %v899, 1
      %v901 = vmax.f32 %v899, %v900
      %v902 = vsel %vm607, %v684, -inf
      %v903 = vrot.slane %v902, 4
      %v904 = vmax.f32 %v902, %v903
      %v905 = vrot.slane %v904, 2
      %v906 = vmax.f32 %v904, %v905
      %v907 = vrot.slane %v906, 1
      %v908 = vmax.f32 %v906, %v907
      %v909 = vsel %vm607, %v691, -inf
      %v910 = vrot.slane %v909, 4
      %v911 = vmax.f32 %v909, %v910
      %v912 = vrot.slane %v911, 2
      %v913 = vmax.f32 %v911, %v912
      %v914 = vrot.slane %v913, 1
      %v915 = vmax.f32 %v913, %v914
      %v916 = vsel %vm607, %v698, -inf
      %v917 = vrot.slane %v916, 4
      %v918 = vmax.f32 %v916, %v917
      %v919 = vrot.slane %v918, 2
      %v920 = vmax.f32 %v918, %v919
      %v921 = vrot.slane %v920, 1
      %v922 = vmax.f32 %v920, %v921
      %v923 = vsel %vm607, %v705, -inf
      %v924 = vrot.slane %v923, 4
      %v925 = vmax.f32 %v923, %v924
      %v926 = vrot.slane %v925, 2
      %v927 = vmax.f32 %v925, %v926
      %v928 = vrot.slane %v927, 1
      %v929 = vmax.f32 %v927, %v928
      %v930 = vsel %vm607, %v712, -inf
      %v931 = vrot.slane %v930, 4
      %v932 = vmax.f32 %v930, %v931
      %v933 = vrot.slane %v932, 2
      %v934 = vmax.f32 %v932, %v933
      %v935 = vrot.slane %v934, 1
      %v936 = vmax.f32 %v934, %v935
      %v937 = vsel %vm607, %v719, -inf
      %v938 = vrot.slane %v937, 4
      %v939 = vmax.f32 %v937, %v938
      %v940 = vrot.slane %v939, 2
      %v941 = vmax.f32 %v939, %v940
      %v942 = vrot.slane %v941, 1
      %v943 = vmax.f32 %v941, %v942
      %v944 = vsel %vm607, %v726, -inf
      %v945 = vrot.slane %v944, 4
      %v946 = vmax.f32 %v944, %v945
      %v947 = vrot.slane %v946, 2
      %v948 = vmax.f32 %v946, %v947
      %v949 = vrot.slane %v948, 1
      %v950 = vmax.f32 %v948, %v949
      %v951 = vsel %vm607, %v733, -inf
      %v952 = vrot.slane %v951, 4
      %v953 = vmax.f32 %v951, %v952
      %v954 = vrot.slane %v953, 2
      %v955 = vmax.f32 %v953, %v954
      %v956 = vrot.slane %v955, 1
      %v957 = vmax.f32 %v955, %v956
      %v958 = vsel %vm607, %v740, -inf
      %v959 = vrot.slane %v958, 4
      %v960 = vmax.f32 %v958, %v959
      %v961 = vrot.slane %v960, 2
      %v962 = vmax.f32 %v960, %v961
      %v963 = vrot.slane %v962, 1
      %v964 = vmax.f32 %v962, %v963
      %v965 = vsel %vm607, %v747, -inf
      %v966 = vrot.slane %v965, 4
      %v967 = vmax.f32 %v965, %v966
      %v968 = vrot.slane %v967, 2
      %v969 = vmax.f32 %v967, %v968
      %v970 = vrot.slane %v969, 1
      %v971 = vmax.f32 %v969, %v970
      %v972 = vsel %vm607, %v754, -inf
      %v973 = vrot.slane %v972, 4
      %v974 = vmax.f32 %v972, %v973
      %v975 = vrot.slane %v974, 2
      %v976 = vmax.f32 %v974, %v975
      %v977 = vrot.slane %v976, 1
      %v978 = vmax.f32 %v976, %v977
      %v979 = vsel %vm607, %v761, -inf
      %v980 = vrot.slane %v979, 4
      %v981 = vmax.f32 %v979, %v980
      %v982 = vrot.slane %v981, 2
      %v983 = vmax.f32 %v981, %v982
      %v984 = vrot.slane %v983, 1
      %v985 = vmax.f32 %v983, %v984
      %v986 = vsel %vm607, %v768, -inf
      %v987 = vrot.slane %v986, 4
      %v988 = vmax.f32 %v986, %v987
      %v989 = vrot.slane %v988, 2
      %v990 = vmax.f32 %v988, %v989
      %v991 = vrot.slane %v990, 1
      %v992 = vmax.f32 %v990, %v991
      %v993 = vsel %vm607, %v775, -inf
      %v994 = vrot.slane %v993, 4
      %v995 = vmax.f32 %v993, %v994
      %v996 = vrot.slane %v995, 2
      %v997 = vmax.f32 %v995, %v996
      %v998 = vrot.slane %v997, 1
      %v999 = vmax.f32 %v997, %v998
      %v1000 = vsel %vm607, %v782, -inf
      %v1001 = vrot.slane %v1000, 4
      %v1002 = vmax.f32 %v1000, %v1001
      %v1003 = vrot.slane %v1002, 2
      %v1004 = vmax.f32 %v1002, %v1003
      %v1005 = vrot.slane %v1004, 1
      %v1006 = vmax.f32 %v1004, %v1005
      %v1007 = vsel %vm607, %v789, -inf
      %v1008 = vrot.slane %v1007, 4
      %v1009 = vmax.f32 %v1007, %v1008
      %v1010 = vrot.slane %v1009, 2
      %v1011 = vmax.f32 %v1009, %v1010
      %v1012 = vrot.slane %v1011, 1
      %v1013 = vmax.f32 %v1011, %v1012
      %v1014 = vsel %vm607, %v796, -inf
      %v1015 = vrot.slane %v1014, 4
      %v1016 = vmax.f32 %v1014, %v1015
      %v1017 = vrot.slane %v1016, 2
      %v1018 = vmax.f32 %v1016, %v1017
      %v1019 = vrot.slane %v1018, 1
      %v1020 = vmax.f32 %v1018, %v1019
      %v1021 = vsel %vm607, %v803, -inf
      %v1022 = vrot.slane %v1021, 4
      %v1023 = vmax.f32 %v1021, %v1022
      %v1024 = vrot.slane %v1023, 2
      %v1025 = vmax.f32 %v1023, %v1024
      %v1026 = vrot.slane %v1025, 1
      %v1027 = vmax.f32 %v1025, %v1026
      %v1028 = vsel %vm607, %v810, -inf
      %v1029 = vrot.slane %v1028, 4
      %v1030 = vmax.f32 %v1028, %v1029
      %v1031 = vrot.slane %v1030, 2
      %v1032 = vmax.f32 %v1030, %v1031
      %v1033 = vrot.slane %v1032, 1
      %v1034 = vmax.f32 %v1032, %v1033
      %v1035 = vsel %vm607, %v817, -inf
      %v1036 = vrot.slane %v1035, 4
      %v1037 = vmax.f32 %v1035, %v1036
      %v1038 = vrot.slane %v1037, 2
      %v1039 = vmax.f32 %v1037, %v1038
      %v1040 = vrot.slane %v1039, 1
      %v1041 = vmax.f32 %v1039, %v1040
      %v1042 = vsel %vm607, %v824, -inf
      %v1043 = vrot.slane %v1042, 4
      %v1044 = vmax.f32 %v1042, %v1043
      %v1045 = vrot.slane %v1044, 2
      %v1046 = vmax.f32 %v1044, %v1045
      %v1047 = vrot.slane %v1046, 1
      %v1048 = vmax.f32 %v1046, %v1047
      %v1049 = vsel %vm607, %v831, -inf
      %v1050 = vrot.slane %v1049, 4
      %v1051 = vmax.f32 %v1049, %v1050
      %v1052 = vrot.slane %v1051, 2
      %v1053 = vmax.f32 %v1051, %v1052
      %v1054 = vrot.slane %v1053, 1
      %v1055 = vmax.f32 %v1053, %v1054
      %v1056 = vadd.f32 %v838, 0.0
      %v1057 = vadd.f32 %v845, 0.0
      %v1058 = vadd.f32 %v852, 0.0
      %v1059 = vadd.f32 %v859, 0.0
      %v1060 = vadd.f32 %v866, 0.0
      %v1061 = vadd.f32 %v873, 0.0
      %v1062 = vadd.f32 %v880, 0.0
      %v1063 = vadd.f32 %v887, 0.0
      %v1064 = vadd.f32 %v894, 0.0
      %v1065 = vadd.f32 %v901, 0.0
      %v1066 = vadd.f32 %v908, 0.0
      %v1067 = vadd.f32 %v915, 0.0
      %v1068 = vadd.f32 %v922, 0.0
      %v1069 = vadd.f32 %v929, 0.0
      %v1070 = vadd.f32 %v936, 0.0
      %v1071 = vadd.f32 %v943, 0.0
      %v1072 = vadd.f32 %v950, 0.0
      %v1073 = vadd.f32 %v957, 0.0
      %v1074 = vadd.f32 %v964, 0.0
      %v1075 = vadd.f32 %v971, 0.0
      %v1076 = vadd.f32 %v978, 0.0
      %v1077 = vadd.f32 %v985, 0.0
      %v1078 = vadd.f32 %v992, 0.0
      %v1079 = vadd.f32 %v999, 0.0
      %v1080 = vadd.f32 %v1006, 0.0
      %v1081 = vadd.f32 %v1013, 0.0
      %v1082 = vadd.f32 %v1020, 0.0
      %v1083 = vadd.f32 %v1027, 0.0
      %v1084 = vadd.f32 %v1034, 0.0
      %v1085 = vadd.f32 %v1041, 0.0
      %v1086 = vadd.f32 %v1048, 0.0
      %v1087 = vadd.f32 %v1055, 0.0
      %v1088 = vld [vmem:[%s319] sm:$0xff]
      %v1089 = vld [vmem:[%s319 + $0x8] sm:$0xff]
      %v1090 = vld [vmem:[%s319 + $0x10] sm:$0xff]
      %v1091 = vld [vmem:[%s319 + $0x18] sm:$0xff]
      %v1092 = vld [vmem:[%s319 + $0x20] sm:$0xff]
      %v1093 = vld [vmem:[%s319 + $0x28] sm:$0xff]
      %v1094 = vld [vmem:[%s319 + $0x30] sm:$0xff]
      %v1095 = vld [vmem:[%s319 + $0x38] sm:$0xff]
      %v1096 = vld [vmem:[%s319 + $0x40] sm:$0xff]
      %v1097 = vld [vmem:[%s319 + $0x48] sm:$0xff]
      %v1098 = vld [vmem:[%s319 + $0x50] sm:$0xff]
      %v1099 = vld [vmem:[%s319 + $0x58] sm:$0xff]
      %v1100 = vld [vmem:[%s319 + $0x60] sm:$0xff]
      %v1101 = vld [vmem:[%s319 + $0x68] sm:$0xff]
      %v1102 = vld [vmem:[%s319 + $0x70] sm:$0xff]
      %v1103 = vld [vmem:[%s319 + $0x78] sm:$0xff]
      %v1120 = vrot.slane %v1088, 2
      %v1121 = vrot.slane %v1088, 4
      %v1122 = vrot.slane %v1088, 6
      %v1123 = vrot.slane %v1089, 2
      %v1124 = vrot.slane %v1089, 4
      %v1125 = vrot.slane %v1089, 6
      %v1126 = vrot.slane %v1090, 2
      %v1127 = vrot.slane %v1090, 4
      %v1128 = vrot.slane %v1090, 6
      %v1129 = vrot.slane %v1091, 2
      %v1130 = vrot.slane %v1091, 4
      %v1131 = vrot.slane %v1091, 6
      %v1132 = vrot.slane %v1092, 2
      %v1133 = vrot.slane %v1092, 4
      %v1134 = vrot.slane %v1092, 6
      %v1135 = vrot.slane %v1093, 2
      %v1136 = vrot.slane %v1093, 4
      %v1137 = vrot.slane %v1093, 6
      %v1138 = vrot.slane %v1094, 2
      %v1139 = vrot.slane %v1094, 4
      %v1140 = vrot.slane %v1094, 6
      %v1141 = vrot.slane %v1095, 2
      %v1142 = vrot.slane %v1095, 4
      %v1143 = vrot.slane %v1095, 6
      %v1144 = vrot.slane %v1096, 2
      %v1145 = vrot.slane %v1096, 4
      %v1146 = vrot.slane %v1096, 6
      %v1147 = vrot.slane %v1097, 2
      %v1148 = vrot.slane %v1097, 4
      %v1149 = vrot.slane %v1097, 6
      %v1150 = vrot.slane %v1098, 2
      %v1151 = vrot.slane %v1098, 4
      %v1152 = vrot.slane %v1098, 6
      %v1153 = vrot.slane %v1099, 2
      %v1154 = vrot.slane %v1099, 4
      %v1155 = vrot.slane %v1099, 6
      %v1156 = vrot.slane %v1100, 2
      %v1157 = vrot.slane %v1100, 4
      %v1158 = vrot.slane %v1100, 6
      %v1159 = vrot.slane %v1101, 2
      %v1160 = vrot.slane %v1101, 4
      %v1161 = vrot.slane %v1101, 6
      %v1162 = vrot.slane %v1102, 2
      %v1163 = vrot.slane %v1102, 4
      %v1164 = vrot.slane %v1102, 6
      %v1165 = vrot.slane %v1103, 2
      %v1166 = vrot.slane %v1103, 4
      %v1167 = vrot.slane %v1103, 6
      %vm1216 = vcmask 25600
      %v1217 = vsel %vm1216, %v1088, -inf
      %v1218 = vsel %vm1216, %v1090, -inf
      %v1219 = vmax.f32 %v1217, %v1218
      %v1220 = vsel %vm1216, %v1120, -inf
      %v1221 = vsel %vm1216, %v1126, -inf
      %v1222 = vmax.f32 %v1220, %v1221
      %v1223 = vsel %vm1216, %v1121, -inf
      %v1224 = vsel %vm1216, %v1127, -inf
      %v1225 = vmax.f32 %v1223, %v1224
      %v1226 = vsel %vm1216, %v1122, -inf
      %v1227 = vsel %vm1216, %v1128, -inf
      %v1228 = vmax.f32 %v1226, %v1227
      %v1229 = vsel %vm1216, %v1089, -inf
      %v1230 = vsel %vm1216, %v1091, -inf
      %v1231 = vmax.f32 %v1229, %v1230
      %v1232 = vsel %vm1216, %v1123, -inf
      %v1233 = vsel %vm1216, %v1129, -inf
      %v1234 = vmax.f32 %v1232, %v1233
      %v1235 = vsel %vm1216, %v1124, -inf
      %v1236 = vsel %vm1216, %v1130, -inf
      %v1237 = vmax.f32 %v1235, %v1236
      %v1238 = vsel %vm1216, %v1125, -inf
      %v1239 = vsel %vm1216, %v1131, -inf
      %v1240 = vmax.f32 %v1238, %v1239
      %v1241 = vsel %vm1216, %v1092, -inf
      %v1242 = vsel %vm1216, %v1094, -inf
      %v1243 = vmax.f32 %v1241, %v1242
      %v1244 = vsel %vm1216, %v1132, -inf
      %v1245 = vsel %vm1216, %v1138, -inf
      %v1246 = vmax.f32 %v1244, %v1245
      %v1247 = vsel %vm1216, %v1133, -inf
      %v1248 = vsel %vm1216, %v1139, -inf
      %v1249 = vmax.f32 %v1247, %v1248
      %v1250 = vsel %vm1216, %v1134, -inf
      %v1251 = vsel %vm1216, %v1140, -inf
      %v1252 = vmax.f32 %v1250, %v1251
      %v1253 = vsel %vm1216, %v1093, -inf
      %v1254 = vsel %vm1216, %v1095, -inf
      %v1255 = vmax.f32 %v1253, %v1254
      %v1256 = vsel %vm1216, %v1135, -inf
      %v1257 = vsel %vm1216, %v1141, -inf
      %v1258 = vmax.f32 %v1256, %v1257
      %v1259 = vsel %vm1216, %v1136, -inf
      %v1260 = vsel %vm1216, %v1142, -inf
      %v1261 = vmax.f32 %v1259, %v1260
      %v1262 = vsel %vm1216, %v1137, -inf
      %v1263 = vsel %vm1216, %v1143, -inf
      %v1264 = vmax.f32 %v1262, %v1263
      %v1265 = vsel %vm1216, %v1096, -inf
      %v1266 = vsel %vm1216, %v1098, -inf
      %v1267 = vmax.f32 %v1265, %v1266
      %v1268 = vsel %vm1216, %v1144, -inf
      %v1269 = vsel %vm1216, %v1150, -inf
      %v1270 = vmax.f32 %v1268, %v1269
      %v1271 = vsel %vm1216, %v1145, -inf
      %v1272 = vsel %vm1216, %v1151, -inf
      %v1273 = vmax.f32 %v1271, %v1272
      %v1274 = vsel %vm1216, %v1146, -inf
      %v1275 = vsel %vm1216, %v1152, -inf
      %v1276 = vmax.f32 %v1274, %v1275
      %v1277 = vsel %vm1216, %v1097, -inf
      %v1278 = vsel %vm1216, %v1099, -inf
      %v1279 = vmax.f32 %v1277, %v1278
      %v1280 = vsel %vm1216, %v1147, -inf
      %v1281 = vsel %vm1216, %v1153, -inf
      %v1282 = vmax.f32 %v1280, %v1281
      %v1283 = vsel %vm1216, %v1148, -inf
      %v1284 = vsel %vm1216, %v1154, -inf
      %v1285 = vmax.f32 %v1283, %v1284
      %v1286 = vsel %vm1216, %v1149, -inf
      %v1287 = vsel %vm1216, %v1155, -inf
      %v1288 = vmax.f32 %v1286, %v1287
      %v1289 = vsel %vm1216, %v1100, -inf
      %v1290 = vsel %vm1216, %v1102, -inf
      %v1291 = vmax.f32 %v1289, %v1290
      %v1292 = vsel %vm1216, %v1156, -inf
      %v1293 = vsel %vm1216, %v1162, -inf
      %v1294 = vmax.f32 %v1292, %v1293
      %v1295 = vsel %vm1216, %v1157, -inf
      %v1296 = vsel %vm1216, %v1163, -inf
      %v1297 = vmax.f32 %v1295, %v1296
      %v1298 = vsel %vm1216, %v1158, -inf
      %v1299 = vsel %vm1216, %v1164, -inf
      %v1300 = vmax.f32 %v1298, %v1299
      %v1301 = vsel %vm1216, %v1101, -inf
      %v1302 = vsel %vm1216, %v1103, -inf
      %v1303 = vmax.f32 %v1301, %v1302
      %v1304 = vsel %vm1216, %v1159, -inf
      %v1305 = vsel %vm1216, %v1165, -inf
      %v1306 = vmax.f32 %v1304, %v1305
      %v1307 = vsel %vm1216, %v1160, -inf
      %v1308 = vsel %vm1216, %v1166, -inf
      %v1309 = vmax.f32 %v1307, %v1308
      %v1310 = vsel %vm1216, %v1161, -inf
      %v1311 = vsel %vm1216, %v1167, -inf
      %v1312 = vmax.f32 %v1310, %v1311
      %v1313 = vsel %vm1216, %v1219, -inf
      %v1314 = vrot.slane %v1313, 4
      %v1315 = vmax.f32 %v1313, %v1314
      %v1316 = vrot.slane %v1315, 2
      %v1317 = vmax.f32 %v1315, %v1316
      %v1318 = vrot.slane %v1317, 1
      %v1319 = vmax.f32 %v1317, %v1318
      %v1320 = vsel %vm1216, %v1222, -inf
      %v1321 = vrot.slane %v1320, 4
      %v1322 = vmax.f32 %v1320, %v1321
      %v1323 = vrot.slane %v1322, 2
      %v1324 = vmax.f32 %v1322, %v1323
      %v1325 = vrot.slane %v1324, 1
      %v1326 = vmax.f32 %v1324, %v1325
      %v1327 = vsel %vm1216, %v1225, -inf
      %v1328 = vrot.slane %v1327, 4
      %v1329 = vmax.f32 %v1327, %v1328
      %v1330 = vrot.slane %v1329, 2
      %v1331 = vmax.f32 %v1329, %v1330
      %v1332 = vrot.slane %v1331, 1
      %v1333 = vmax.f32 %v1331, %v1332
      %v1334 = vsel %vm1216, %v1228, -inf
      %v1335 = vrot.slane %v1334, 4
      %v1336 = vmax.f32 %v1334, %v1335
      %v1337 = vrot.slane %v1336, 2
      %v1338 = vmax.f32 %v1336, %v1337
      %v1339 = vrot.slane %v1338, 1
      %v1340 = vmax.f32 %v1338, %v1339
      %v1341 = vsel %vm1216, %v1231, -inf
      %v1342 = vrot.slane %v1341, 4
      %v1343 = vmax.f32 %v1341, %v1342
      %v1344 = vrot.slane %v1343, 2
      %v1345 = vmax.f32 %v1343, %v1344
      %v1346 = vrot.slane %v1345, 1
      %v1347 = vmax.f32 %v1345, %v1346
      %v1348 = vsel %vm1216, %v1234, -inf
      %v1349 = vrot.slane %v1348, 4
      %v1350 = vmax.f32 %v1348, %v1349
      %v1351 = vrot.slane %v1350, 2
      %v1352 = vmax.f32 %v1350, %v1351
      %v1353 = vrot.slane %v1352, 1
      %v1354 = vmax.f32 %v1352, %v1353
      %v1355 = vsel %vm1216, %v1237, -inf
      %v1356 = vrot.slane %v1355, 4
      %v1357 = vmax.f32 %v1355, %v1356
      %v1358 = vrot.slane %v1357, 2
      %v1359 = vmax.f32 %v1357, %v1358
      %v1360 = vrot.slane %v1359, 1
      %v1361 = vmax.f32 %v1359, %v1360
      %v1362 = vsel %vm1216, %v1240, -inf
      %v1363 = vrot.slane %v1362, 4
      %v1364 = vmax.f32 %v1362, %v1363
      %v1365 = vrot.slane %v1364, 2
      %v1366 = vmax.f32 %v1364, %v1365
      %v1367 = vrot.slane %v1366, 1
      %v1368 = vmax.f32 %v1366, %v1367
      %v1369 = vsel %vm1216, %v1243, -inf
      %v1370 = vrot.slane %v1369, 4
      %v1371 = vmax.f32 %v1369, %v1370
      %v1372 = vrot.slane %v1371, 2
      %v1373 = vmax.f32 %v1371, %v1372
      %v1374 = vrot.slane %v1373, 1
      %v1375 = vmax.f32 %v1373, %v1374
      %v1376 = vsel %vm1216, %v1246, -inf
      %v1377 = vrot.slane %v1376, 4
      %v1378 = vmax.f32 %v1376, %v1377
      %v1379 = vrot.slane %v1378, 2
      %v1380 = vmax.f32 %v1378, %v1379
      %v1381 = vrot.slane %v1380, 1
      %v1382 = vmax.f32 %v1380, %v1381
      %v1383 = vsel %vm1216, %v1249, -inf
      %v1384 = vrot.slane %v1383, 4
      %v1385 = vmax.f32 %v1383, %v1384
      %v1386 = vrot.slane %v1385, 2
      %v1387 = vmax.f32 %v1385, %v1386
      %v1388 = vrot.slane %v1387, 1
      %v1389 = vmax.f32 %v1387, %v1388
      %v1390 = vsel %vm1216, %v1252, -inf
      %v1391 = vrot.slane %v1390, 4
      %v1392 = vmax.f32 %v1390, %v1391
      %v1393 = vrot.slane %v1392, 2
      %v1394 = vmax.f32 %v1392, %v1393
      %v1395 = vrot.slane %v1394, 1
      %v1396 = vmax.f32 %v1394, %v1395
      %v1397 = vsel %vm1216, %v1255, -inf
      %v1398 = vrot.slane %v1397, 4
      %v1399 = vmax.f32 %v1397, %v1398
      %v1400 = vrot.slane %v1399, 2
      %v1401 = vmax.f32 %v1399, %v1400
      %v1402 = vrot.slane %v1401, 1
      %v1403 = vmax.f32 %v1401, %v1402
      %v1404 = vsel %vm1216, %v1258, -inf
      %v1405 = vrot.slane %v1404, 4
      %v1406 = vmax.f32 %v1404, %v1405
      %v1407 = vrot.slane %v1406, 2
      %v1408 = vmax.f32 %v1406, %v1407
      %v1409 = vrot.slane %v1408, 1
      %v1410 = vmax.f32 %v1408, %v1409
      %v1411 = vsel %vm1216, %v1261, -inf
      %v1412 = vrot.slane %v1411, 4
      %v1413 = vmax.f32 %v1411, %v1412
      %v1414 = vrot.slane %v1413, 2
      %v1415 = vmax.f32 %v1413, %v1414
      %v1416 = vrot.slane %v1415, 1
      %v1417 = vmax.f32 %v1415, %v1416
      %v1418 = vsel %vm1216, %v1264, -inf
      %v1419 = vrot.slane %v1418, 4
      %v1420 = vmax.f32 %v1418, %v1419
      %v1421 = vrot.slane %v1420, 2
      %v1422 = vmax.f32 %v1420, %v1421
      %v1423 = vrot.slane %v1422, 1
      %v1424 = vmax.f32 %v1422, %v1423
      %v1425 = vsel %vm1216, %v1267, -inf
      %v1426 = vrot.slane %v1425, 4
      %v1427 = vmax.f32 %v1425, %v1426
      %v1428 = vrot.slane %v1427, 2
      %v1429 = vmax.f32 %v1427, %v1428
      %v1430 = vrot.slane %v1429, 1
      %v1431 = vmax.f32 %v1429, %v1430
      %v1432 = vsel %vm1216, %v1270, -inf
      %v1433 = vrot.slane %v1432, 4
      %v1434 = vmax.f32 %v1432, %v1433
      %v1435 = vrot.slane %v1434, 2
      %v1436 = vmax.f32 %v1434, %v1435
      %v1437 = vrot.slane %v1436, 1
      %v1438 = vmax.f32 %v1436, %v1437
      %v1439 = vsel %vm1216, %v1273, -inf
      %v1440 = vrot.slane %v1439, 4
      %v1441 = vmax.f32 %v1439, %v1440
      %v1442 = vrot.slane %v1441, 2
      %v1443 = vmax.f32 %v1441, %v1442
      %v1444 = vrot.slane %v1443, 1
      %v1445 = vmax.f32 %v1443, %v1444
      %v1446 = vsel %vm1216, %v1276, -inf
      %v1447 = vrot.slane %v1446, 4
      %v1448 = vmax.f32 %v1446, %v1447
      %v1449 = vrot.slane %v1448, 2
      %v1450 = vmax.f32 %v1448, %v1449
      %v1451 = vrot.slane %v1450, 1
      %v1452 = vmax.f32 %v1450, %v1451
      %v1453 = vsel %vm1216, %v1279, -inf
      %v1454 = vrot.slane %v1453, 4
      %v1455 = vmax.f32 %v1453, %v1454
      %v1456 = vrot.slane %v1455, 2
      %v1457 = vmax.f32 %v1455, %v1456
      %v1458 = vrot.slane %v1457, 1
      %v1459 = vmax.f32 %v1457, %v1458
      %v1460 = vsel %vm1216, %v1282, -inf
      %v1461 = vrot.slane %v1460, 4
      %v1462 = vmax.f32 %v1460, %v1461
      %v1463 = vrot.slane %v1462, 2
      %v1464 = vmax.f32 %v1462, %v1463
      %v1465 = vrot.slane %v1464, 1
      %v1466 = vmax.f32 %v1464, %v1465
      %v1467 = vsel %vm1216, %v1285, -inf
      %v1468 = vrot.slane %v1467, 4
      %v1469 = vmax.f32 %v1467, %v1468
      %v1470 = vrot.slane %v1469, 2
      %v1471 = vmax.f32 %v1469, %v1470
      %v1472 = vrot.slane %v1471, 1
      %v1473 = vmax.f32 %v1471, %v1472
      %v1474 = vsel %vm1216, %v1288, -inf
      %v1475 = vrot.slane %v1474, 4
      %v1476 = vmax.f32 %v1474, %v1475
      %v1477 = vrot.slane %v1476, 2
      %v1478 = vmax.f32 %v1476, %v1477
      %v1479 = vrot.slane %v1478, 1
      %v1480 = vmax.f32 %v1478, %v1479
      %v1481 = vsel %vm1216, %v1291, -inf
      %v1482 = vrot.slane %v1481, 4
      %v1483 = vmax.f32 %v1481, %v1482
      %v1484 = vrot.slane %v1483, 2
      %v1485 = vmax.f32 %v1483, %v1484
      %v1486 = vrot.slane %v1485, 1
      %v1487 = vmax.f32 %v1485, %v1486
      %v1488 = vsel %vm1216, %v1294, -inf
      %v1489 = vrot.slane %v1488, 4
      %v1490 = vmax.f32 %v1488, %v1489
      %v1491 = vrot.slane %v1490, 2
      %v1492 = vmax.f32 %v1490, %v1491
      %v1493 = vrot.slane %v1492, 1
      %v1494 = vmax.f32 %v1492, %v1493
      %v1495 = vsel %vm1216, %v1297, -inf
      %v1496 = vrot.slane %v1495, 4
      %v1497 = vmax.f32 %v1495, %v1496
      %v1498 = vrot.slane %v1497, 2
      %v1499 = vmax.f32 %v1497, %v1498
      %v1500 = vrot.slane %v1499, 1
      %v1501 = vmax.f32 %v1499, %v1500
      %v1502 = vsel %vm1216, %v1300, -inf
      %v1503 = vrot.slane %v1502, 4
      %v1504 = vmax.f32 %v1502, %v1503
      %v1505 = vrot.slane %v1504, 2
      %v1506 = vmax.f32 %v1504, %v1505
      %v1507 = vrot.slane %v1506, 1
      %v1508 = vmax.f32 %v1506, %v1507
      %v1509 = vsel %vm1216, %v1303, -inf
      %v1510 = vrot.slane %v1509, 4
      %v1511 = vmax.f32 %v1509, %v1510
      %v1512 = vrot.slane %v1511, 2
      %v1513 = vmax.f32 %v1511, %v1512
      %v1514 = vrot.slane %v1513, 1
      %v1515 = vmax.f32 %v1513, %v1514
      %v1516 = vsel %vm1216, %v1306, -inf
      %v1517 = vrot.slane %v1516, 4
      %v1518 = vmax.f32 %v1516, %v1517
      %v1519 = vrot.slane %v1518, 2
      %v1520 = vmax.f32 %v1518, %v1519
      %v1521 = vrot.slane %v1520, 1
      %v1522 = vmax.f32 %v1520, %v1521
      %v1523 = vsel %vm1216, %v1309, -inf
      %v1524 = vrot.slane %v1523, 4
      %v1525 = vmax.f32 %v1523, %v1524
      %v1526 = vrot.slane %v1525, 2
      %v1527 = vmax.f32 %v1525, %v1526
      %v1528 = vrot.slane %v1527, 1
      %v1529 = vmax.f32 %v1527, %v1528
      %v1530 = vsel %vm1216, %v1312, -inf
      %v1531 = vrot.slane %v1530, 4
      %v1532 = vmax.f32 %v1530, %v1531
      %v1533 = vrot.slane %v1532, 2
      %v1534 = vmax.f32 %v1532, %v1533
      %v1535 = vrot.slane %v1534, 1
      %v1536 = vmax.f32 %v1534, %v1535
      %v1537 = vadd.f32 %v1056, %v1319
      %v1538 = vadd.f32 %v1057, %v1326
      %v1539 = vadd.f32 %v1058, %v1333
      %v1540 = vadd.f32 %v1059, %v1340
      %v1541 = vadd.f32 %v1060, %v1347
      %v1542 = vadd.f32 %v1061, %v1354
      %v1543 = vadd.f32 %v1062, %v1361
      %v1544 = vadd.f32 %v1063, %v1368
      %v1545 = vadd.f32 %v1064, %v1375
      %v1546 = vadd.f32 %v1065, %v1382
      %v1547 = vadd.f32 %v1066, %v1389
      %v1548 = vadd.f32 %v1067, %v1396
      %v1549 = vadd.f32 %v1068, %v1403
      %v1550 = vadd.f32 %v1069, %v1410
      %v1551 = vadd.f32 %v1070, %v1417
      %v1552 = vadd.f32 %v1071, %v1424
      %v1553 = vadd.f32 %v1072, %v1431
      %v1554 = vadd.f32 %v1073, %v1438
      %v1555 = vadd.f32 %v1074, %v1445
      %v1556 = vadd.f32 %v1075, %v1452
      %v1557 = vadd.f32 %v1076, %v1459
      %v1558 = vadd.f32 %v1077, %v1466
      %v1559 = vadd.f32 %v1078, %v1473
      %v1560 = vadd.f32 %v1079, %v1480
      %v1561 = vadd.f32 %v1080, %v1487
      %v1562 = vadd.f32 %v1081, %v1494
      %v1563 = vadd.f32 %v1082, %v1501
      %v1564 = vadd.f32 %v1083, %v1508
      %v1565 = vadd.f32 %v1084, %v1515
      %v1566 = vadd.f32 %v1085, %v1522
      %v1567 = vadd.f32 %v1086, %v1529
      %v1568 = vadd.f32 %v1087, %v1536
      %v1569 = vld [vmem:[%s329] sm:$0xff]
      %v1570 = vld [vmem:[%s329 + $0x8] sm:$0xff]
      %v1571 = vld [vmem:[%s329 + $0x10] sm:$0xff]
      %v1572 = vld [vmem:[%s329 + $0x18] sm:$0xff]
      %v1577 = vrot.slane %v1569, 1
      %v1578 = vrot.slane %v1569, 2
      %v1579 = vrot.slane %v1569, 3
      %v1580 = vrot.slane %v1569, 4
      %v1581 = vrot.slane %v1569, 5
      %v1582 = vrot.slane %v1569, 6
      %v1583 = vrot.slane %v1569, 7
      %v1584 = vrot.slane %v1570, 1
      %v1585 = vrot.slane %v1570, 2
      %v1586 = vrot.slane %v1570, 3
      %v1587 = vrot.slane %v1570, 4
      %v1588 = vrot.slane %v1570, 5
      %v1589 = vrot.slane %v1570, 6
      %v1590 = vrot.slane %v1570, 7
      %v1591 = vrot.slane %v1571, 1
      %v1592 = vrot.slane %v1571, 2
      %v1593 = vrot.slane %v1571, 3
      %v1594 = vrot.slane %v1571, 4
      %v1595 = vrot.slane %v1571, 5
      %v1596 = vrot.slane %v1571, 6
      %v1597 = vrot.slane %v1571, 7
      %v1598 = vrot.slane %v1572, 1
      %v1599 = vrot.slane %v1572, 2
      %v1600 = vrot.slane %v1572, 3
      %v1601 = vrot.slane %v1572, 4
      %v1602 = vrot.slane %v1572, 5
      %v1603 = vrot.slane %v1572, 6
      %v1604 = vrot.slane %v1572, 7
      %v1637 = vadd.f32 %v1537, %v1569
      %v1638 = vadd.f32 %v1538, %v1577
      %v1639 = vadd.f32 %v1539, %v1578
      %v1640 = vadd.f32 %v1540, %v1579
      %v1641 = vadd.f32 %v1541, %v1580
      %v1642 = vadd.f32 %v1542, %v1581
      %v1643 = vadd.f32 %v1543, %v1582
      %v1644 = vadd.f32 %v1544, %v1583
      %v1645 = vadd.f32 %v1545, %v1570
      %v1646 = vadd.f32 %v1546, %v1584
      %v1647 = vadd.f32 %v1547, %v1585
      %v1648 = vadd.f32 %v1548, %v1586
      %v1649 = vadd.f32 %v1549, %v1587
      %v1650 = vadd.f32 %v1550, %v1588
      %v1651 = vadd.f32 %v1551, %v1589
      %v1652 = vadd.f32 %v1552, %v1590
      %v1653 = vadd.f32 %v1553, %v1571
      %v1654 = vadd.f32 %v1554, %v1591
      %v1655 = vadd.f32 %v1555, %v1592
      %v1656 = vadd.f32 %v1556, %v1593
      %v1657 = vadd.f32 %v1557, %v1594
      %v1658 = vadd.f32 %v1558, %v1595
      %v1659 = vadd.f32 %v1559, %v1596
      %v1660 = vadd.f32 %v1560, %v1597
      %v1661 = vadd.f32 %v1561, %v1572
      %v1662 = vadd.f32 %v1562, %v1598
      %v1663 = vadd.f32 %v1563, %v1599
      %v1664 = vadd.f32 %v1564, %v1600
      %v1665 = vadd.f32 %v1565, %v1601
      %v1666 = vadd.f32 %v1566, %v1602
      %v1667 = vadd.f32 %v1567, %v1603
      %v1668 = vadd.f32 %v1568, %v1604
      %v1669 = vld [vmem:[%s339] sm:$0xf]
      %v1670 = vld [vmem:[%s339 + $0x4] sm:$0xf]
      %v1673 = vrot.slane %v1669, 1
      %v1674 = vrot.slane %v1669, 2
      %v1675 = vrot.slane %v1669, 3
      %v1676 = vrot.slane %v1670, 1
      %v1677 = vrot.slane %v1670, 2
      %v1678 = vrot.slane %v1670, 3
      %v1679 = vperm.slane %v1669, 0
      %v1680 = vperm.slane %v1673, 0
      %v1681 = vperm.slane %v1674, 0
      %v1682 = vperm.slane %v1675, 0
      %v1683 = vperm.slane %v1670, 0
      %v1684 = vperm.slane %v1676, 0
      %v1685 = vperm.slane %v1677, 0
      %v1686 = vperm.slane %v1678, 0
      %1687 = vst [vmem:[#allocation1] ss:$4 sm:$0xff] %v1679
      %s1688 = scalar_lea.vmem [#allocation1], 1
      %1689 = vst [vmem:[%s1688] ss:$4 sm:$0xff] %v1680
      %s1690 = scalar_lea.vmem [#allocation1], 2
      %1691 = vst [vmem:[%s1690] ss:$4 sm:$0xff] %v1681
      %s1692 = scalar_lea.vmem [#allocation1], 3
      %1693 = vst [vmem:[%s1692] ss:$4 sm:$0xff] %v1682
      %v1694 = vld.sshfl [vmem:[#allocation1] sm:$0xff pattern:$0x73625140]
      %s1695 = scalar_lea.vmem [#allocation1], 32
      %1696 = vst [vmem:[%s1695] ss:$4 sm:$0xff] %v1679
      %s1697 = scalar_lea.vmem [#allocation1], 33
      %1698 = vst [vmem:[%s1697] ss:$4 sm:$0xff] %v1680
      %s1699 = scalar_lea.vmem [#allocation1], 34
      %1700 = vst [vmem:[%s1699] ss:$4 sm:$0xff] %v1681
      %s1701 = scalar_lea.vmem [#allocation1], 35
      %1702 = vst [vmem:[%s1701] ss:$4 sm:$0xff] %v1682
      %v1703 = vld.sshfl [vmem:[#allocation1 + $0x20] sm:$0xff pattern:$0x73625140]
      %1704 = vst [vmem:[#allocation1] ss:$4 sm:$0xff] %v1683
      %1705 = vst [vmem:[%s1688] ss:$4 sm:$0xff] %v1684
      %1706 = vst [vmem:[%s1690] ss:$4 sm:$0xff] %v1685
      %1707 = vst [vmem:[%s1692] ss:$4 sm:$0xff] %v1686
      %v1708 = vld.sshfl [vmem:[#allocation1] sm:$0xff pattern:$0x73625140]
      %1709 = vst [vmem:[%s1695] ss:$4 sm:$0xff] %v1683
      %1710 = vst [vmem:[%s1697] ss:$4 sm:$0xff] %v1684
      %1711 = vst [vmem:[%s1699] ss:$4 sm:$0xff] %v1685
      %1712 = vst [vmem:[%s1701] ss:$4 sm:$0xff] %v1686
      %v1713 = vld.sshfl [vmem:[#allocation1 + $0x20] sm:$0xff pattern:$0x73625140]
      %v1714 = vrot.slane %v1694, 1
      %v1715 = vrot.slane %v1694, 2
      %v1716 = vrot.slane %v1694, 3
      %v1717 = vrot.slane %v1694, 4
      %v1718 = vrot.slane %v1694, 5
      %v1719 = vrot.slane %v1694, 6
      %v1720 = vrot.slane %v1694, 7
      %v1721 = vrot.slane %v1703, 1
      %v1722 = vrot.slane %v1703, 2
      %v1723 = vrot.slane %v1703, 3
      %v1724 = vrot.slane %v1703, 4
      %v1725 = vrot.slane %v1703, 5
      %v1726 = vrot.slane %v1703, 6
      %v1727 = vrot.slane %v1703, 7
      %v1728 = vrot.slane %v1708, 1
      %v1729 = vrot.slane %v1708, 2
      %v1730 = vrot.slane %v1708, 3
      %v1731 = vrot.slane %v1708, 4
      %v1732 = vrot.slane %v1708, 5
      %v1733 = vrot.slane %v1708, 6
      %v1734 = vrot.slane %v1708, 7
      %v1735 = vrot.slane %v1713, 1
      %v1736 = vrot.slane %v1713, 2
      %v1737 = vrot.slane %v1713, 3
      %v1738 = vrot.slane %v1713, 4
      %v1739 = vrot.slane %v1713, 5
      %v1740 = vrot.slane %v1713, 6
      %v1741 = vrot.slane %v1713, 7
      %v1774 = vadd.f32 %v1637, %v1694
      %v1775 = vadd.f32 %v1638, %v1714
      %v1776 = vadd.f32 %v1639, %v1715
      %v1777 = vadd.f32 %v1640, %v1716
      %v1778 = vadd.f32 %v1641, %v1717
      %v1779 = vadd.f32 %v1642, %v1718
      %v1780 = vadd.f32 %v1643, %v1719
      %v1781 = vadd.f32 %v1644, %v1720
      %v1782 = vadd.f32 %v1645, %v1703
      %v1783 = vadd.f32 %v1646, %v1721
      %v1784 = vadd.f32 %v1647, %v1722
      %v1785 = vadd.f32 %v1648, %v1723
      %v1786 = vadd.f32 %v1649, %v1724
      %v1787 = vadd.f32 %v1650, %v1725
      %v1788 = vadd.f32 %v1651, %v1726
      %v1789 = vadd.f32 %v1652, %v1727
      %v1790 = vadd.f32 %v1653, %v1708
      %v1791 = vadd.f32 %v1654, %v1728
      %v1792 = vadd.f32 %v1655, %v1729
      %v1793 = vadd.f32 %v1656, %v1730
      %v1794 = vadd.f32 %v1657, %v1731
      %v1795 = vadd.f32 %v1658, %v1732
      %v1796 = vadd.f32 %v1659, %v1733
      %v1797 = vadd.f32 %v1660, %v1734
      %v1798 = vadd.f32 %v1661, %v1713
      %v1799 = vadd.f32 %v1662, %v1735
      %v1800 = vadd.f32 %v1663, %v1736
      %v1801 = vadd.f32 %v1664, %v1737
      %v1802 = vadd.f32 %v1665, %v1738
      %v1803 = vadd.f32 %v1666, %v1739
      %v1804 = vadd.f32 %v1667, %v1740
      %v1805 = vadd.f32 %v1668, %v1741
      %v1806 = vmul.f32 %v1774, 0.25
      %v1807 = vmul.f32 %v1775, 0.25
      %v1808 = vmul.f32 %v1776, 0.25
      %v1809 = vmul.f32 %v1777, 0.25
      %v1810 = vmul.f32 %v1778, 0.25
      %v1811 = vmul.f32 %v1779, 0.25
      %v1812 = vmul.f32 %v1780, 0.25
      %v1813 = vmul.f32 %v1781, 0.25
      %v1814 = vmul.f32 %v1782, 0.25
      %v1815 = vmul.f32 %v1783, 0.25
      %v1816 = vmul.f32 %v1784, 0.25
      %v1817 = vmul.f32 %v1785, 0.25
      %v1818 = vmul.f32 %v1786, 0.25
      %v1819 = vmul.f32 %v1787, 0.25
      %v1820 = vmul.f32 %v1788, 0.25
      %v1821 = vmul.f32 %v1789, 0.25
      %v1822 = vmul.f32 %v1790, 0.25
      %v1823 = vmul.f32 %v1791, 0.25
      %v1824 = vmul.f32 %v1792, 0.25
      %v1825 = vmul.f32 %v1793, 0.25
      %v1826 = vmul.f32 %v1794, 0.25
      %v1827 = vmul.f32 %v1795, 0.25
      %v1828 = vmul.f32 %v1796, 0.25
      %v1829 = vmul.f32 %v1797, 0.25
      %v1830 = vmul.f32 %v1798, 0.25
      %v1831 = vmul.f32 %v1799, 0.25
      %v1832 = vmul.f32 %v1800, 0.25
      %v1833 = vmul.f32 %v1801, 0.25
      %v1834 = vmul.f32 %v1802, 0.25
      %v1835 = vmul.f32 %v1803, 0.25
      %v1836 = vmul.f32 %v1804, 0.25
      %v1837 = vmul.f32 %v1805, 0.25
      %v1838 = vpack.c.bf16 %v1806, %v1806
      %v1839 = vpack.c.bf16 %v1807, %v1807
      %v1840 = vpack.c.bf16 %v1808, %v1808
      %v1841 = vpack.c.bf16 %v1809, %v1809
      %v1842 = vpack.c.bf16 %v1810, %v1810
      %v1843 = vpack.c.bf16 %v1811, %v1811
      %v1844 = vpack.c.bf16 %v1812, %v1812
      %v1845 = vpack.c.bf16 %v1813, %v1813
      %v1846 = vpack.c.bf16 %v1814, %v1814
      %v1847 = vpack.c.bf16 %v1815, %v1815
      %v1848 = vpack.c.bf16 %v1816, %v1816
      %v1849 = vpack.c.bf16 %v1817, %v1817
      %v1850 = vpack.c.bf16 %v1818, %v1818
      %v1851 = vpack.c.bf16 %v1819, %v1819
      %v1852 = vpack.c.bf16 %v1820, %v1820
      %v1853 = vpack.c.bf16 %v1821, %v1821
      %v1854 = vpack.c.bf16 %v1822, %v1822
      %v1855 = vpack.c.bf16 %v1823, %v1823
      %v1856 = vpack.c.bf16 %v1824, %v1824
      %v1857 = vpack.c.bf16 %v1825, %v1825
      %v1858 = vpack.c.bf16 %v1826, %v1826
      %v1859 = vpack.c.bf16 %v1827, %v1827
      %v1860 = vpack.c.bf16 %v1828, %v1828
      %v1861 = vpack.c.bf16 %v1829, %v1829
      %v1862 = vpack.c.bf16 %v1830, %v1830
      %v1863 = vpack.c.bf16 %v1831, %v1831
      %v1864 = vpack.c.bf16 %v1832, %v1832
      %v1865 = vpack.c.bf16 %v1833, %v1833
      %v1866 = vpack.c.bf16 %v1834, %v1834
      %v1867 = vpack.c.bf16 %v1835, %v1835
      %v1868 = vpack.c.bf16 %v1836, %v1836
      %v1869 = vpack.c.bf16 %v1837, %v1837
      %v1902 = vunpack.c.l.b16 %v1838
      %v1903 = vunpack.c.l.b16 %v1839
      %v1904 = vunpack.c.l.b16 %v1840
      %v1905 = vunpack.c.l.b16 %v1841
      %v1906 = vunpack.c.l.b16 %v1842
      %v1907 = vunpack.c.l.b16 %v1843
      %v1908 = vunpack.c.l.b16 %v1844
      %v1909 = vunpack.c.l.b16 %v1845
      %v1910 = vunpack.c.l.b16 %v1846
      %v1911 = vunpack.c.l.b16 %v1847
      %v1912 = vunpack.c.l.b16 %v1848
      %v1913 = vunpack.c.l.b16 %v1849
      %v1914 = vunpack.c.l.b16 %v1850
      %v1915 = vunpack.c.l.b16 %v1851
      %v1916 = vunpack.c.l.b16 %v1852
      %v1917 = vunpack.c.l.b16 %v1853
      %v1918 = vunpack.c.l.b16 %v1854
      %v1919 = vunpack.c.l.b16 %v1855
      %v1920 = vunpack.c.l.b16 %v1856
      %v1921 = vunpack.c.l.b16 %v1857
      %v1922 = vunpack.c.l.b16 %v1858
      %v1923 = vunpack.c.l.b16 %v1859
      %v1924 = vunpack.c.l.b16 %v1860
      %v1925 = vunpack.c.l.b16 %v1861
      %v1926 = vunpack.c.l.b16 %v1862
      %v1927 = vunpack.c.l.b16 %v1863
      %v1928 = vunpack.c.l.b16 %v1864
      %v1929 = vunpack.c.l.b16 %v1865
      %v1930 = vunpack.c.l.b16 %v1866
      %v1931 = vunpack.c.l.b16 %v1867
      %v1932 = vunpack.c.l.b16 %v1868
      %v1933 = vunpack.c.l.b16 %v1869
      %v1934 = vrot.slane %v1903, 7
      %vm1935 = vcmask 1041409
      %v1936 = vsel %vm1935, %v1934, %v1902
      %v1937 = vrot.slane %v1904, 6
      %vm1938 = vcmask 1042434
      %v1939 = vsel %vm1938, %v1937, %v1936
      %v1940 = vrot.slane %v1905, 5
      %vm1941 = vcmask 1043459
      %v1942 = vsel %vm1941, %v1940, %v1939
      %v1943 = vrot.slane %v1906, 4
      %vm1944 = vcmask 1044484
      %v1945 = vsel %vm1944, %v1943, %v1942
      %v1946 = vrot.slane %v1907, 3
      %vm1947 = vcmask 1045509
      %v1948 = vsel %vm1947, %v1946, %v1945
      %v1949 = vrot.slane %v1908, 2
      %vm1950 = vcmask 1046534
      %v1951 = vsel %vm1950, %v1949, %v1948
      %v1952 = vrot.slane %v1909, 1
      %vm1953 = vcmask 1047559
      %v1954 = vsel %vm1953, %v1952, %v1951
      %v1955 = vrot.slane %v1911, 7
      %v1956 = vsel %vm1935, %v1955, %v1910
      %v1957 = vrot.slane %v1912, 6
      %v1958 = vsel %vm1938, %v1957, %v1956
      %v1959 = vrot.slane %v1913, 5
      %v1960 = vsel %vm1941, %v1959, %v1958
      %v1961 = vrot.slane %v1914, 4
      %v1962 = vsel %vm1944, %v1961, %v1960
      %v1963 = vrot.slane %v1915, 3
      %v1964 = vsel %vm1947, %v1963, %v1962
      %v1965 = vrot.slane %v1916, 2
      %v1966 = vsel %vm1950, %v1965, %v1964
      %v1967 = vrot.slane %v1917, 1
      %v1968 = vsel %vm1953, %v1967, %v1966
      %v1969 = vrot.slane %v1919, 7
      %v1970 = vsel %vm1935, %v1969, %v1918
      %v1971 = vrot.slane %v1920, 6
      %v1972 = vsel %vm1938, %v1971, %v1970
      %v1973 = vrot.slane %v1921, 5
      %v1974 = vsel %vm1941, %v1973, %v1972
      %v1975 = vrot.slane %v1922, 4
      %v1976 = vsel %vm1944, %v1975, %v1974
      %v1977 = vrot.slane %v1923, 3
      %v1978 = vsel %vm1947, %v1977, %v1976
      %v1979 = vrot.slane %v1924, 2
      %v1980 = vsel %vm1950, %v1979, %v1978
      %v1981 = vrot.slane %v1925, 1
      %v1982 = vsel %vm1953, %v1981, %v1980
      %v1983 = vrot.slane %v1927, 7
      %v1984 = vsel %vm1935, %v1983, %v1926
      %v1985 = vrot.slane %v1928, 6
      %v1986 = vsel %vm1938, %v1985, %v1984
      %v1987 = vrot.slane %v1929, 5
      %v1988 = vsel %vm1941, %v1987, %v1986
      %v1989 = vrot.slane %v1930, 4
      %v1990 = vsel %vm1944, %v1989, %v1988
      %v1991 = vrot.slane %v1931, 3
      %v1992 = vsel %vm1947, %v1991, %v1990
      %v1993 = vrot.slane %v1932, 2
      %v1994 = vsel %vm1950, %v1993, %v1992
      %v1995 = vrot.slane %v1933, 1
      %v1996 = vsel %vm1953, %v1995, %v1994
      %v1997 = vpack.c.b16 %v1954, %v1954
      %v1998 = vpack.c.b16 %v1968, %v1968
      %v1999 = vpack.c.b16 %v1982, %v1982
      %v2000 = vpack.c.b16 %v1996, %v1996
      %2005 = vst.msk [vmem:[%s349] sm:$0xf] %vm607, %v1997
      %2006 = vst.msk [vmem:[%s349 + $0x4] sm:$0xf] %vm607, %v1998
      %2007 = vst.msk [vmem:[%s349 + $0x8] sm:$0xf] %vm607, %v1999
      %2008 = vst.msk [vmem:[%s349 + $0xc] sm:$0xf] %vm607, %v2000
      %s2009 = smul.u32 4, %s20
      %p2010 = scmp.lt.s32.totalorder %s19, 1
      %s2011 = scalar_select %p2010, %s19, 1
      %p2012 = scmp.lt.s32.totalorder %s2009, 7
      %s2013 = scalar_select %p2012, %s2009, 7
      %s2014 = smul.addr %s2011, 8
      %s2015 = sadd.s32 %s2013, %s2014
      %s2016 = smul.addr %s2015, 4
      %s2017 = scalar_lea.vmem %s4, %s2016
      // Predicated region
      $region37: #{tpu_custom_call.1} parent=35 // pred_check
        %p2018 = pneg %p159
      $region38: #{tpu_custom_call.1} parent=35 // pred_check_branch
        %2020 = sbr.rel (%p2018) target = $region40
      $region39: #{tpu_custom_call.1} parent=35 // pred_region
        %s2021 = smul.u32 4, %s20
      $region40: #{tpu_custom_call.1} parent=35 // pred_fallthru
        _
    $region36: #{tpu_custom_call.1} parent=5 // pred_fallthru
      _
    %p2022 = scmp.le.s32.totalorder 2, %s10
    // Predicated region
    $region41: #{tpu_custom_call.1} parent=5 // pred_check
      %p2023 = pneg %p2022
    $region42: #{tpu_custom_call.1} parent=5 // pred_check_branch
      %2025 = sbr.rel (%p2023) target = $region44
    $region43: #{tpu_custom_call.1} parent=5 // pred_region
      %s2026 = ssub.s32 %s10, 2
      // Predicated region
      $region45: #{tpu_custom_call.1} parent=43 // pred_check
        %p2027 = pneg %p165
      $region46: #{tpu_custom_call.1} parent=43 // pred_check_branch
        %2029 = sbr.rel (%p2027) target = $region48
      $region47: #{tpu_custom_call.1} parent=43 // pred_region
        %s2030 = smul.u32 4, %s22
        %p2031 = scmp.lt.s32.totalorder %s21, 1
        %s2032 = scalar_select %p2031, %s21, 1
        %p2033 = scmp.lt.s32.totalorder %s2030, 7
        %s2034 = scalar_select %p2033, %s2030, 7
        %s2035 = smul.addr %s2032, 8
        %s2036 = sadd.s32 %s2034, %s2035
        %s2037 = smul.addr %s2036, 4
        %s2038 = scalar_lea.vmem %s4, %s2037
      $region48: #{tpu_custom_call.1} parent=43 // pred_fallthru
        _
    $region44: #{tpu_custom_call.1} parent=5 // pred_fallthru
      _
  $region6: #{tpu_custom_call.1} parent=0 // loop_footer
    %s14 = sadd.s32 1, %s10
  $region7: #{tpu_custom_call.1} parent=0 // loop_footer_branch
    %9 = sbr.rel target = $region3
  $region8: #{tpu_custom_call.1} parent=0 // loop_exit
    _

</llo_original>
